<compile_context>
chip_gen: v5e
topology: v5e:2x2
jax: 0.10.0
libtpu: 0.0.40
codegen_flags: <defaults>
</compile_context>

<pallas_src>
import math

import numpy as np
import jax
import jax.numpy as jnp
from jax import lax
from jax.experimental import pallas as pl
from jax.experimental.pallas import tpu as pltpu

# ----------------------------- config (small synthetic shapes) ---------------
N_VOCAB = 32
D_LATENT = 16
D_MODEL = 32
N_LAYERS = 2
N_HEAD = 4
D_K = 8
D_V = 8
D_INNER = 64
N_SEQ_MAX = 16
PAD_ID = 0
LN_EPS = 1e-6
V_PAD = 128                       # lane-dense padded vocab width for the output store

VO_W = N_HEAD * D_MODEL           # 128 : fused V@Wo columns (head-major), lanes 0-127
Q_BASE = VO_W                     # 128 : Q columns start
K_BASE = Q_BASE + N_HEAD * D_K    # 160 : K columns start
PROJ_W = K_BASE + N_HEAD * D_K    # 192 : fused [VO | Q | K] projection width


# ------------------------------- kernel --------------------------------------
def _layer_norm(x, gamma, beta, eps=LN_EPS):
    # one-pass variance: E[x^2] - E[x]^2 -> two back-to-back lane reduces
    mu = jnp.mean(x, axis=-1, keepdims=True)
    ms = jnp.mean(x * x, axis=-1, keepdims=True)
    var = ms - mu * mu
    return (x - mu) * lax.rsqrt(var + eps) * gamma + beta


def _decoder_kernel(valid_ref, x_ref, ln_ref, wproj_ref, w1_ref, bff_ref,
                    w2_ref, wprj_ref, out_ref):
    slen = x_ref.shape[0]
    x = x_ref[...]                                  # (S, d_model) f32

    # additive causal + key-pad bias built in-kernel (0 keep / -1e9 mask)
    valid = valid_ref[0]                            # (1, S): 1.0 = real token
    qpos = lax.broadcasted_iota(jnp.int32, (slen, slen), 0)
    kpos = lax.broadcasted_iota(jnp.int32, (slen, slen), 1)
    keep = (kpos <= qpos) & (valid > 0.5)
    bias = jnp.where(keep, 0.0, -1e9).astype(jnp.float32)   # (S, S)

    # shared pre-attention LayerNorm
    ln0 = ln_ref[0]
    x = _layer_norm(x, ln0[0:1, :], ln0[1:2, :])

    inv_temp = 1.0 / math.sqrt(D_K)

    for l in range(N_LAYERS):
        # ---------- multi-head self attention (post-LN, residual) ----------
        residual = x
        # one fused projection matmul per layer: [VO(128) | Q(32) | K(32)]
        proj = jnp.dot(x, wproj_ref[l], preferred_element_type=jnp.float32)  # (S, 192)

        q = jnp.stack([proj[:, Q_BASE + h * D_K:Q_BASE + (h + 1) * D_K]
                       for h in range(N_HEAD)], axis=0)                      # (H, S, dk)
        k = jnp.stack([proj[:, K_BASE + h * D_K:K_BASE + (h + 1) * D_K]
                       for h in range(N_HEAD)], axis=0)                      # (H, S, dk)
        vo = jnp.stack([proj[:, h * D_MODEL:(h + 1) * D_MODEL]
                        for h in range(N_HEAD)], axis=0)                     # (H, S, d)

        # head-batched scores + ONE softmax per layer
        s = jnp.einsum("hqd,hkd->hqk", q, k,
                       preferred_element_type=jnp.float32) * inv_temp + bias
        s = s - jnp.max(s, axis=-1, keepdims=True)
        p = jnp.exp(s)
        p = p * pl.reciprocal(jnp.sum(p, axis=-1, keepdims=True), approx=True)

        ctx = jnp.einsum("hqk,hkd->hqd", p, vo,
                         preferred_element_type=jnp.float32)                 # (H, S, d)
        attn = ctx[0]
        for h in range(1, N_HEAD):                                           # cheap head merge
            attn = attn + ctx[h]                                             # (S, d)

        ln1 = ln_ref[1 + l]
        x = _layer_norm(residual + attn, ln1[0:1, :], ln1[1:2, :])

        # ---------- position-wise feed forward (post-LN, residual) ----------
        residual = x
        bff = bff_ref[l]                                                     # (2, d_inner)
        h1 = jnp.dot(x, w1_ref[l], preferred_element_type=jnp.float32) + bff[0:1, :]
        h1 = jnp.maximum(h1, 0.0)
        h2 = jnp.dot(h1, w2_ref[l], preferred_element_type=jnp.float32) + bff[1:2, 0:D_MODEL]
        ln2 = ln_ref[1 + N_LAYERS + l]
        x = _layer_norm(residual + h2, ln2[0:1, :], ln2[1:2, :])

    # tied word projection, lane-dense (vocab zero-padded to 128)
    out_ref[...] = jnp.dot(x, wprj_ref[...], preferred_element_type=jnp.float32)


def run_decoder_kernel(valid, x_flat, kp, batch):
    n_tok = x_flat.shape[0]
    seq_len = n_tok // batch

    def resident(arr):
        nd = arr.ndim

        def imap(b):
            return (0,) * nd
        return pl.BlockSpec(arr.shape, imap)

    in_specs = [
        pl.BlockSpec((1, 1, seq_len), lambda b: (b, 0, 0)),     # key-valid (B,1,S)
        pl.BlockSpec((seq_len, D_MODEL), lambda b: (b, 0)),     # tokens of batch b
        resident(kp["ln_all"]),
        resident(kp["wproj"]),
        resident(kp["w1"]),
        resident(kp["bff"]),
        resident(kp["w2"]),
        resident(kp["wprj_pad"]),
    ]
    out_specs = pl.BlockSpec((seq_len, V_PAD), lambda b: (b, 0))

    return pl.pallas_call(
        _decoder_kernel,
        out_shape=jax.ShapeDtypeStruct((n_tok, V_PAD), jnp.float32),
        grid=(batch,),
        in_specs=in_specs,
        out_specs=out_specs,
        compiler_params=pltpu.CompilerParams(
            dimension_semantics=("parallel",)),     # v7x: shard batch over both TCs
    )(valid, x_flat, kp["ln_all"], kp["wproj"], kp["w1"], kp["bff"],
      kp["w2"], kp["wprj_pad"])


# ------------------------------ parameters -----------------------------------
def sinusoid_table(n_position, d_hid):
    # TODO(synk): standard 10000-base sinusoid table used in place of
    # SinusoidEncoder(angle_cycle=10000/(2*pi)); same structure, fixed base.
    pos = np.arange(n_position)[:, None].astype(np.float64)
    j = np.arange(d_hid)[None, :]
    angle = pos / np.power(10000.0, 2 * (j // 2) / d_hid)
    table = np.zeros((n_position, d_hid), dtype=np.float32)
    table[:, 0::2] = np.sin(angle[:, 0::2])
    table[:, 1::2] = np.cos(angle[:, 1::2])
    return jnp.asarray(table)


def make_kernel_layout(p):
    """Kernel weight re-layout: fused [V@Wo | Q | K] projection, packed LN / FFN biases."""
    wv = p["wv"].reshape(N_LAYERS, D_MODEL, N_HEAD, D_V).transpose(0, 2, 1, 3)   # (L,H,d,dv)
    wo = p["wo"].reshape(N_LAYERS, N_HEAD, D_V, D_MODEL)                          # (L,H,dv,d)
    wvo = jnp.einsum("lhdv,lhve->lhde", wv, wo)                                   # (L,H,d,d)
    wvo = wvo.transpose(0, 2, 1, 3).reshape(N_LAYERS, D_MODEL, VO_W)              # (L,d,H*d)
    # TODO(synk): at larger d_model un-fuse V and Wo (review item 6); at d_model=32
    # the fused form avoids a minor-dim concat and an extra matmul for negligible MACs.
    wproj = jnp.concatenate([wvo, p["wq"], p["wk"]], axis=-1)                     # (L,d,192)

    ln_all = jnp.concatenate([p["ln0"][None], p["ln1"], p["ln2"]], axis=0)        # (1+2L,2,d)

    bff = jnp.zeros((N_LAYERS, 2, D_INNER), jnp.float32)
    bff = bff.at[:, 0:1, :].set(p["b1"])
    bff = bff.at[:, 1:2, :D_MODEL].set(p["b2"])

    wprj_pad = jnp.pad(p["wprj"], ((0, 0), (0, V_PAD - N_VOCAB)))
    return dict(ln_all=ln_all, wproj=wproj, w1=p["w1"], bff=bff, w2=p["w2"],
                wprj_pad=wprj_pad)


def init_params(key):
    keys = jax.random.split(key, 12)

    def nrm(k, shape, s=0.05):
        return (s * jax.random.normal(k, shape)).astype(jnp.float32)

    word_emb = nrm(keys[0], (N_VOCAB, D_MODEL))
    word_emb = word_emb.at[PAD_ID].set(0.0)          # nn.Embedding padding_idx

    ln_pair = jnp.stack([jnp.ones((D_MODEL,), jnp.float32),
                         jnp.zeros((D_MODEL,), jnp.float32)])  # (2, d)

    params = dict(
        word_emb=word_emb,
        wprj=word_emb.T,                              # tied: word_prj.weight = word_emb.weight
        latent_emb_w=nrm(keys[1], (D_LATENT, D_MODEL)),
        latent_emb_b=nrm(keys[2], (D_MODEL,)),
        ln0=ln_pair,
        wq=nrm(keys[3], (N_LAYERS, D_MODEL, N_HEAD * D_K)),
        wk=nrm(keys[4], (N_LAYERS, D_MODEL, N_HEAD * D_K)),
        wv=nrm(keys[5], (N_LAYERS, D_MODEL, N_HEAD * D_V)),
        wo=nrm(keys[6], (N_LAYERS, N_HEAD * D_V, D_MODEL)),
        ln1=jnp.tile(ln_pair[None], (N_LAYERS, 1, 1)),
        w1=nrm(keys[7], (N_LAYERS, D_MODEL, D_INNER)),
        b1=nrm(keys[8], (N_LAYERS, 1, D_INNER)),
        w2=nrm(keys[9], (N_LAYERS, D_INNER, D_MODEL)),
        b2=nrm(keys[10], (N_LAYERS, 1, D_MODEL)),
        ln2=jnp.tile(ln_pair[None], (N_LAYERS, 1, 1)),
        pos_table=sinusoid_table(N_SEQ_MAX, D_MODEL),
    )
    params["kernel"] = make_kernel_layout(params)
    return params


# --------------------------- forward (glue + kernel) --------------------------
def seqshare_decoder_forward(seq, pos, latent, params, mask=None):
    """SeqShareDecoderWithPosition.forward -> (B, S, n_vocab) logits."""
    B, S = seq.shape
    valid = (seq != PAD_ID) if mask is None else mask          # get_pad_mask / mask
    valid = valid.astype(jnp.float32)[:, None, :]              # (B, 1, S) key validity

    summary = latent @ params["latent_emb_w"] + params["latent_emb_b"]  # latent_emb
    x = params["word_emb"][seq]                                # word_emb
    x = x.at[:, 0].add(summary)                                # x[:, 0] += summary
    x = x * (D_MODEL ** 0.5)                                   # x *= sqrt(d_model)
    x = x + params["pos_table"][pos]                           # position_enc(pos)
    # dropout: eval mode -> identity

    x_flat = x.reshape(B * S, D_MODEL).astype(jnp.float32)
    out = run_decoder_kernel(valid, x_flat, params["kernel"], B)
    return out.reshape(B, S, V_PAD)[:, :, :N_VOCAB]


# ---------------------------- pure-JAX reference ------------------------------
def reference_forward(seq, pos, latent, params, mask=None):
    B, S = seq.shape
    pad_mask = (seq != PAD_ID)[:, None, :] if mask is None else mask[:, None, :]
    subsequent = jnp.tril(jnp.ones((S, S), dtype=bool))
    full_mask = pad_mask & subsequent[None]

    summary = latent @ params["latent_emb_w"] + params["latent_emb_b"]
    x = params["word_emb"][seq]
    x = x.at[:, 0].add(summary)
    x = x * (D_MODEL ** 0.5)
    x = x + params["pos_table"][pos]

    def ln(x, g, b):
        mu = x.mean(-1, keepdims=True)
        var = ((x - mu) ** 2).mean(-1, keepdims=True)
        return (x - mu) / jnp.sqrt(var + LN_EPS) * g + b

    x = ln(x, params["ln0"][0], params["ln0"][1])
    for l in range(N_LAYERS):
        res = x
        q = (x @ params["wq"][l]).reshape(B, S, N_HEAD, D_K).transpose(0, 2, 1, 3)
        k = (x @ params["wk"][l]).reshape(B, S, N_HEAD, D_K).transpose(0, 2, 1, 3)
        v = (x @ params["wv"][l]).reshape(B, S, N_HEAD, D_V).transpose(0, 2, 1, 3)
        s = jnp.einsum("bhqd,bhkd->bhqk", q, k) / math.sqrt(D_K)
        s = jnp.where(full_mask[:, None, :, :], s, -1e9)
        p = jax.nn.softmax(s, axis=-1)
        o = jnp.einsum("bhqk,bhkd->bhqd", p, v)
        o = o.transpose(0, 2, 1, 3).reshape(B, S, N_HEAD * D_V) @ params["wo"][l]
        x = ln(res + o, params["ln1"][l, 0], params["ln1"][l, 1])
        res = x
        h1 = jax.nn.relu(x @ params["w1"][l] + params["b1"][l])
        h2 = h1 @ params["w2"][l] + params["b2"][l]
        x = ln(res + h2, params["ln2"][l, 0], params["ln2"][l, 1])
    return x @ params["wprj"]


# ----------------------------------- main -------------------------------------
if __name__ == "__main__":
    key = jax.random.PRNGKey(0)
    pkey, lkey = jax.random.split(key)
    params = init_params(pkey)

    B, S = 2, 8
    # each row: non-pad prefix followed by trailing pads
    seq = jnp.array([[3, 7, 4, 5, 0, 0, 0, 0],
                     [2, 6, 9, 8, 11, 5, 0, 0]], dtype=jnp.int32)
    pos = jnp.tile(jnp.arange(S, dtype=jnp.int32)[None], (B, 1))
    latent = jax.random.normal(lkey, (B, D_LATENT), dtype=jnp.float32)

    out = seqshare_decoder_forward(seq, pos, latent, params)
    out = jax.block_until_ready(out)

    ref = jax.block_until_ready(reference_forward(seq, pos, latent, params))
    np.testing.assert_allclose(np.asarray(out), np.asarray(ref),
                               rtol=2e-2, atol=2e-2)

    print("KERNEL_OK")
</pallas_src>

<mosaic_0001>
module attributes {stable_mosaic.version = 11 : i64} {
  func.func @_decoder_kernel(%arg0: i32, %arg1: memref<1x1x8xf32, #tpu.memory_space<vmem>>, %arg2: memref<8x32xf32, #tpu.memory_space<vmem>>, %arg3: memref<5x2x32xf32, #tpu.memory_space<vmem>>, %arg4: memref<2x32x192xf32, #tpu.memory_space<vmem>>, %arg5: memref<2x32x64xf32, #tpu.memory_space<vmem>>, %arg6: memref<2x2x64xf32, #tpu.memory_space<vmem>>, %arg7: memref<2x64x32xf32, #tpu.memory_space<vmem>>, %arg8: memref<32x128xf32, #tpu.memory_space<vmem>>, %arg9: memref<8x128xf32, #tpu.memory_space<vmem>>) attributes {dimension_semantics = [#tpu.dimension_semantics<parallel>], iteration_bounds = array<i64: 2>, scalar_prefetch = 0 : i64, scratch_operands = 0 : i64, tpu.core_type = #tpu.core_type<tc>, window_params = [{transform_indices = @transform_0, window_bounds = array<i64: 1, 1, 8>}, {transform_indices = @transform_1, window_bounds = array<i64: 8, 32>}, {pipeline_mode = #tpu.pipeline_mode<synchronous>, transform_indices = @transform_2, window_bounds = array<i64: 5, 2, 32>}, {pipeline_mode = #tpu.pipeline_mode<synchronous>, transform_indices = @transform_3, window_bounds = array<i64: 2, 32, 192>}, {pipeline_mode = #tpu.pipeline_mode<synchronous>, transform_indices = @transform_4, window_bounds = array<i64: 2, 32, 64>}, {pipeline_mode = #tpu.pipeline_mode<synchronous>, transform_indices = @transform_5, window_bounds = array<i64: 2, 2, 64>}, {pipeline_mode = #tpu.pipeline_mode<synchronous>, transform_indices = @transform_6, window_bounds = array<i64: 2, 64, 32>}, {pipeline_mode = #tpu.pipeline_mode<synchronous>, transform_indices = @transform_7, window_bounds = array<i64: 32, 128>}, {transform_indices = @transform_8, window_bounds = array<i64: 8, 128>}]} {
    %c0 = arith.constant 0 : index
    %c0_0 = arith.constant 0 : index
    %0 = vector.load %arg2[%c0, %c0_0] : memref<8x32xf32, #tpu.memory_space<vmem>>, vector<8x32xf32>
    %c0_1 = arith.constant 0 : index
    %c0_2 = arith.constant 0 : index
    %c0_3 = arith.constant 0 : index
    %1 = vector.load %arg1[%c0_1, %c0_2, %c0_3] : memref<1x1x8xf32, #tpu.memory_space<vmem>>, vector<1x1x8xf32>
    %2 = vector.shape_cast %1 : vector<1x1x8xf32> to vector<1x8xf32>
    %3 = tpu.iota {dimensions = array<i32: 0>} : vector<8x8xi32>
    %4 = tpu.iota {dimensions = array<i32: 1>} : vector<8x8xi32>
    %5 = arith.cmpi sle, %4, %3 : vector<8x8xi32>
    %cst = arith.constant 5.000000e-01 : f32
    %6 = vector.broadcast %cst : f32 to vector<1x8xf32>
    %7 = arith.cmpf ogt, %2, %6 : vector<1x8xf32>
    %8 = vector.broadcast %7 : vector<1x8xi1> to vector<8x8xi1>
    %9 = arith.andi %5, %8 : vector<8x8xi1>
    %cst_4 = arith.constant 0.000000e+00 : f32
    %cst_5 = arith.constant -1.000000e+09 : f32
    %10 = vector.broadcast %cst_4 : f32 to vector<8x8xf32>
    %11 = vector.broadcast %cst_5 : f32 to vector<8x8xf32>
    %12 = arith.select %9, %10, %11 : vector<8x8xi1>, vector<8x8xf32>
    %c0_6 = arith.constant 0 : index
    %c0_7 = arith.constant 0 : index
    %c0_8 = arith.constant 0 : index
    %13 = vector.load %arg3[%c0_6, %c0_7, %c0_8] : memref<5x2x32xf32, #tpu.memory_space<vmem>>, vector<1x2x32xf32>
    %14 = vector.shape_cast %13 : vector<1x2x32xf32> to vector<2x32xf32>
    %15 = vector.extract_strided_slice %14 {offsets = [0, 0], sizes = [1, 32], strides = [1, 1]} : vector<2x32xf32> to vector<1x32xf32>
    %16 = vector.extract_strided_slice %14 {offsets = [1, 0], sizes = [1, 32], strides = [1, 1]} : vector<2x32xf32> to vector<1x32xf32>
    %cst_9 = arith.constant dense<0.000000e+00> : vector<8xf32>
    %17 = vector.multi_reduction <add>, %0, %cst_9 [1] : vector<8x32xf32> to vector<8xf32>
    %18 = vector.shape_cast %17 : vector<8xf32> to vector<8x1xf32>
    %cst_10 = arith.constant 3.200000e+01 : f32
    %19 = vector.broadcast %cst_10 : f32 to vector<8x1xf32>
    %20 = arith.divf %18, %19 : vector<8x1xf32>
    %21 = arith.mulf %0, %0 : vector<8x32xf32>
    %cst_11 = arith.constant dense<0.000000e+00> : vector<8xf32>
    %22 = vector.multi_reduction <add>, %21, %cst_11 [1] : vector<8x32xf32> to vector<8xf32>
    %23 = vector.shape_cast %22 : vector<8xf32> to vector<8x1xf32>
    %cst_12 = arith.constant 3.200000e+01 : f32
    %24 = vector.broadcast %cst_12 : f32 to vector<8x1xf32>
    %25 = arith.divf %23, %24 : vector<8x1xf32>
    %26 = arith.mulf %20, %20 : vector<8x1xf32>
    %27 = arith.subf %25, %26 : vector<8x1xf32>
    %28 = vector.broadcast %20 : vector<8x1xf32> to vector<8x32xf32>
    %29 = arith.subf %0, %28 : vector<8x32xf32>
    %cst_13 = arith.constant 9.99999997E-7 : f32
    %30 = vector.broadcast %cst_13 : f32 to vector<8x1xf32>
    %31 = arith.addf %27, %30 : vector<8x1xf32>
    %32 = math.rsqrt %31 : vector<8x1xf32>
    %33 = vector.broadcast %32 : vector<8x1xf32> to vector<8x32xf32>
    %34 = arith.mulf %29, %33 : vector<8x32xf32>
    %35 = vector.broadcast %15 : vector<1x32xf32> to vector<8x32xf32>
    %36 = arith.mulf %34, %35 : vector<8x32xf32>
    %37 = vector.broadcast %16 : vector<1x32xf32> to vector<8x32xf32>
    %38 = arith.addf %36, %37 : vector<8x32xf32>
    %c0_14 = arith.constant 0 : index
    %c0_15 = arith.constant 0 : index
    %c0_16 = arith.constant 0 : index
    %39 = vector.load %arg4[%c0_14, %c0_15, %c0_16] : memref<2x32x192xf32, #tpu.memory_space<vmem>>, vector<1x32x192xf32>
    %40 = vector.shape_cast %39 : vector<1x32x192xf32> to vector<32x192xf32>
    %cst_17 = arith.constant dense<0.000000e+00> : vector<8x192xf32>
    %41 = tpu.matmul %38, %40, %cst_17 {dimension_numbers = #tpu.dot_dimension_numbers<[1], [0], [0], [1], [0, 0, 1, 1], [], []>} : vector<8x32xf32>, vector<32x192xf32>, vector<8x192xf32> -> vector<8x192xf32>
    %42 = vector.extract_strided_slice %41 {offsets = [0, 128], sizes = [8, 8], strides = [1, 1]} : vector<8x192xf32> to vector<8x8xf32>
    %43 = vector.extract_strided_slice %41 {offsets = [0, 136], sizes = [8, 8], strides = [1, 1]} : vector<8x192xf32> to vector<8x8xf32>
    %44 = vector.extract_strided_slice %41 {offsets = [0, 144], sizes = [8, 8], strides = [1, 1]} : vector<8x192xf32> to vector<8x8xf32>
    %45 = vector.extract_strided_slice %41 {offsets = [0, 152], sizes = [8, 8], strides = [1, 1]} : vector<8x192xf32> to vector<8x8xf32>
    %46 = vector.shape_cast %42 : vector<8x8xf32> to vector<1x8x8xf32>
    %47 = vector.shape_cast %43 : vector<8x8xf32> to vector<1x8x8xf32>
    %48 = vector.shape_cast %44 : vector<8x8xf32> to vector<1x8x8xf32>
    %49 = vector.shape_cast %45 : vector<8x8xf32> to vector<1x8x8xf32>
    %50 = tpu.concatenate %46, %47, %48, %49 in 0 : vector<1x8x8xf32>, vector<1x8x8xf32>, vector<1x8x8xf32>, vector<1x8x8xf32> -> vector<4x8x8xf32>
    %51 = vector.extract_strided_slice %41 {offsets = [0, 160], sizes = [8, 8], strides = [1, 1]} : vector<8x192xf32> to vector<8x8xf32>
    %52 = vector.extract_strided_slice %41 {offsets = [0, 168], sizes = [8, 8], strides = [1, 1]} : vector<8x192xf32> to vector<8x8xf32>
    %53 = vector.extract_strided_slice %41 {offsets = [0, 176], sizes = [8, 8], strides = [1, 1]} : vector<8x192xf32> to vector<8x8xf32>
    %54 = vector.extract_strided_slice %41 {offsets = [0, 184], sizes = [8, 8], strides = [1, 1]} : vector<8x192xf32> to vector<8x8xf32>
    %55 = vector.shape_cast %51 : vector<8x8xf32> to vector<1x8x8xf32>
    %56 = vector.shape_cast %52 : vector<8x8xf32> to vector<1x8x8xf32>
    %57 = vector.shape_cast %53 : vector<8x8xf32> to vector<1x8x8xf32>
    %58 = vector.shape_cast %54 : vector<8x8xf32> to vector<1x8x8xf32>
    %59 = tpu.concatenate %55, %56, %57, %58 in 0 : vector<1x8x8xf32>, vector<1x8x8xf32>, vector<1x8x8xf32>, vector<1x8x8xf32> -> vector<4x8x8xf32>
    %60 = vector.extract_strided_slice %41 {offsets = [0, 0], sizes = [8, 32], strides = [1, 1]} : vector<8x192xf32> to vector<8x32xf32>
    %61 = vector.extract_strided_slice %41 {offsets = [0, 32], sizes = [8, 32], strides = [1, 1]} : vector<8x192xf32> to vector<8x32xf32>
    %62 = vector.extract_strided_slice %41 {offsets = [0, 64], sizes = [8, 32], strides = [1, 1]} : vector<8x192xf32> to vector<8x32xf32>
    %63 = vector.extract_strided_slice %41 {offsets = [0, 96], sizes = [8, 32], strides = [1, 1]} : vector<8x192xf32> to vector<8x32xf32>
    %64 = vector.shape_cast %60 : vector<8x32xf32> to vector<1x8x32xf32>
    %65 = vector.shape_cast %61 : vector<8x32xf32> to vector<1x8x32xf32>
    %66 = vector.shape_cast %62 : vector<8x32xf32> to vector<1x8x32xf32>
    %67 = vector.shape_cast %63 : vector<8x32xf32> to vector<1x8x32xf32>
    %68 = tpu.concatenate %64, %65, %66, %67 in 0 : vector<1x8x32xf32>, vector<1x8x32xf32>, vector<1x8x32xf32>, vector<1x8x32xf32> -> vector<4x8x32xf32>
    "tpu.trace_start"() <{level = 10 : i32, message = "hqd,hkd->hqk"}> : () -> ()
    %cst_18 = arith.constant dense<0.000000e+00> : vector<4x8x8xf32>
    %69 = tpu.matmul %50, %59, %cst_18 {dimension_numbers = #tpu.dot_dimension_numbers<[2], [2], [1], [1], [0, 0, 0, 1, 1, 1], [0], [0]>} : vector<4x8x8xf32>, vector<4x8x8xf32>, vector<4x8x8xf32> -> vector<4x8x8xf32>
    "tpu.trace_stop"() : () -> ()
    %cst_19 = arith.constant 0.353553385 : f32
    %70 = vector.broadcast %cst_19 : f32 to vector<4x8x8xf32>
    %71 = arith.mulf %69, %70 : vector<4x8x8xf32>
    %72 = vector.shape_cast %12 : vector<8x8xf32> to vector<1x8x8xf32>
    %73 = vector.broadcast %72 : vector<1x8x8xf32> to vector<4x8x8xf32>
    %74 = arith.addf %71, %73 : vector<4x8x8xf32>
    %cst_20 = arith.constant dense<0xFF800000> : vector<4x8xf32>
    %75 = vector.multi_reduction <maximumf>, %74, %cst_20 [2] : vector<4x8x8xf32> to vector<4x8xf32>
    %76 = vector.shape_cast %75 : vector<4x8xf32> to vector<4x8x1xf32>
    %77 = vector.broadcast %76 : vector<4x8x1xf32> to vector<4x8x8xf32>
    %78 = arith.subf %74, %77 : vector<4x8x8xf32>
    %79 = math.exp %78 : vector<4x8x8xf32>
    %cst_21 = arith.constant dense<0.000000e+00> : vector<4x8xf32>
    %80 = vector.multi_reduction <add>, %79, %cst_21 [2] : vector<4x8x8xf32> to vector<4x8xf32>
    %81 = vector.shape_cast %80 : vector<4x8xf32> to vector<4x8x1xf32>
    %82 = tpu.reciprocal %81 {approx = true} : vector<4x8x1xf32> -> vector<4x8x1xf32>
    %83 = vector.broadcast %82 : vector<4x8x1xf32> to vector<4x8x8xf32>
    %84 = arith.mulf %79, %83 : vector<4x8x8xf32>
    "tpu.trace_start"() <{level = 10 : i32, message = "hqk,hkd->hqd"}> : () -> ()
    %cst_22 = arith.constant dense<0.000000e+00> : vector<4x8x32xf32>
    %85 = tpu.matmul %84, %68, %cst_22 {dimension_numbers = #tpu.dot_dimension_numbers<[2], [1], [1], [2], [0, 0, 0, 1, 1, 2], [0], [0]>} : vector<4x8x8xf32>, vector<4x8x32xf32>, vector<4x8x32xf32> -> vector<4x8x32xf32>
    "tpu.trace_stop"() : () -> ()
    %86 = vector.extract_strided_slice %85 {offsets = [0, 0, 0], sizes = [1, 8, 32], strides = [1, 1, 1]} : vector<4x8x32xf32> to vector<1x8x32xf32>
    %87 = vector.shape_cast %86 : vector<1x8x32xf32> to vector<8x32xf32>
    %88 = vector.extract_strided_slice %85 {offsets = [1, 0, 0], sizes = [1, 8, 32], strides = [1, 1, 1]} : vector<4x8x32xf32> to vector<1x8x32xf32>
    %89 = vector.shape_cast %88 : vector<1x8x32xf32> to vector<8x32xf32>
    %90 = arith.addf %87, %89 : vector<8x32xf32>
    %91 = vector.extract_strided_slice %85 {offsets = [2, 0, 0], sizes = [1, 8, 32], strides = [1, 1, 1]} : vector<4x8x32xf32> to vector<1x8x32xf32>
    %92 = vector.shape_cast %91 : vector<1x8x32xf32> to vector<8x32xf32>
    %93 = arith.addf %90, %92 : vector<8x32xf32>
    %94 = vector.extract_strided_slice %85 {offsets = [3, 0, 0], sizes = [1, 8, 32], strides = [1, 1, 1]} : vector<4x8x32xf32> to vector<1x8x32xf32>
    %95 = vector.shape_cast %94 : vector<1x8x32xf32> to vector<8x32xf32>
    %96 = arith.addf %93, %95 : vector<8x32xf32>
    %c1 = arith.constant 1 : index
    %c0_23 = arith.constant 0 : index
    %c0_24 = arith.constant 0 : index
    %97 = vector.load %arg3[%c1, %c0_23, %c0_24] : memref<5x2x32xf32, #tpu.memory_space<vmem>>, vector<1x2x32xf32>
    %98 = vector.shape_cast %97 : vector<1x2x32xf32> to vector<2x32xf32>
    %99 = arith.addf %38, %96 : vector<8x32xf32>
    %100 = vector.extract_strided_slice %98 {offsets = [0, 0], sizes = [1, 32], strides = [1, 1]} : vector<2x32xf32> to vector<1x32xf32>
    %101 = vector.extract_strided_slice %98 {offsets = [1, 0], sizes = [1, 32], strides = [1, 1]} : vector<2x32xf32> to vector<1x32xf32>
    %cst_25 = arith.constant dense<0.000000e+00> : vector<8xf32>
    %102 = vector.multi_reduction <add>, %99, %cst_25 [1] : vector<8x32xf32> to vector<8xf32>
    %103 = vector.shape_cast %102 : vector<8xf32> to vector<8x1xf32>
    %cst_26 = arith.constant 3.200000e+01 : f32
    %104 = vector.broadcast %cst_26 : f32 to vector<8x1xf32>
    %105 = arith.divf %103, %104 : vector<8x1xf32>
    %106 = arith.mulf %99, %99 : vector<8x32xf32>
    %cst_27 = arith.constant dense<0.000000e+00> : vector<8xf32>
    %107 = vector.multi_reduction <add>, %106, %cst_27 [1] : vector<8x32xf32> to vector<8xf32>
    %108 = vector.shape_cast %107 : vector<8xf32> to vector<8x1xf32>
    %cst_28 = arith.constant 3.200000e+01 : f32
    %109 = vector.broadcast %cst_28 : f32 to vector<8x1xf32>
    %110 = arith.divf %108, %109 : vector<8x1xf32>
    %111 = arith.mulf %105, %105 : vector<8x1xf32>
    %112 = arith.subf %110, %111 : vector<8x1xf32>
    %113 = vector.broadcast %105 : vector<8x1xf32> to vector<8x32xf32>
    %114 = arith.subf %99, %113 : vector<8x32xf32>
    %cst_29 = arith.constant 9.99999997E-7 : f32
    %115 = vector.broadcast %cst_29 : f32 to vector<8x1xf32>
    %116 = arith.addf %112, %115 : vector<8x1xf32>
    %117 = math.rsqrt %116 : vector<8x1xf32>
    %118 = vector.broadcast %117 : vector<8x1xf32> to vector<8x32xf32>
    %119 = arith.mulf %114, %118 : vector<8x32xf32>
    %120 = vector.broadcast %100 : vector<1x32xf32> to vector<8x32xf32>
    %121 = arith.mulf %119, %120 : vector<8x32xf32>
    %122 = vector.broadcast %101 : vector<1x32xf32> to vector<8x32xf32>
    %123 = arith.addf %121, %122 : vector<8x32xf32>
    %c0_30 = arith.constant 0 : index
    %c0_31 = arith.constant 0 : index
    %c0_32 = arith.constant 0 : index
    %124 = vector.load %arg6[%c0_30, %c0_31, %c0_32] : memref<2x2x64xf32, #tpu.memory_space<vmem>>, vector<1x2x64xf32>
    %125 = vector.shape_cast %124 : vector<1x2x64xf32> to vector<2x64xf32>
    %c0_33 = arith.constant 0 : index
    %c0_34 = arith.constant 0 : index
    %c0_35 = arith.constant 0 : index
    %126 = vector.load %arg5[%c0_33, %c0_34, %c0_35] : memref<2x32x64xf32, #tpu.memory_space<vmem>>, vector<1x32x64xf32>
    %127 = vector.shape_cast %126 : vector<1x32x64xf32> to vector<32x64xf32>
    %cst_36 = arith.constant dense<0.000000e+00> : vector<8x64xf32>
    %128 = tpu.matmul %123, %127, %cst_36 {dimension_numbers = #tpu.dot_dimension_numbers<[1], [0], [0], [1], [0, 0, 1, 1], [], []>} : vector<8x32xf32>, vector<32x64xf32>, vector<8x64xf32> -> vector<8x64xf32>
    %129 = vector.extract_strided_slice %125 {offsets = [0, 0], sizes = [1, 64], strides = [1, 1]} : vector<2x64xf32> to vector<1x64xf32>
    %130 = vector.broadcast %129 : vector<1x64xf32> to vector<8x64xf32>
    %131 = arith.addf %128, %130 : vector<8x64xf32>
    %cst_37 = arith.constant 0.000000e+00 : f32
    %132 = vector.broadcast %cst_37 : f32 to vector<8x64xf32>
    %133 = arith.maximumf %131, %132 : vector<8x64xf32>
    %c0_38 = arith.constant 0 : index
    %c0_39 = arith.constant 0 : index
    %c0_40 = arith.constant 0 : index
    %134 = vector.load %arg7[%c0_38, %c0_39, %c0_40] : memref<2x64x32xf32, #tpu.memory_space<vmem>>, vector<1x64x32xf32>
    %135 = vector.shape_cast %134 : vector<1x64x32xf32> to vector<64x32xf32>
    %cst_41 = arith.constant dense<0.000000e+00> : vector<8x32xf32>
    %136 = tpu.matmul %133, %135, %cst_41 {dimension_numbers = #tpu.dot_dimension_numbers<[1], [0], [0], [1], [0, 0, 1, 1], [], []>} : vector<8x64xf32>, vector<64x32xf32>, vector<8x32xf32> -> vector<8x32xf32>
    %137 = vector.extract_strided_slice %125 {offsets = [1, 0], sizes = [1, 32], strides = [1, 1]} : vector<2x64xf32> to vector<1x32xf32>
    %138 = vector.broadcast %137 : vector<1x32xf32> to vector<8x32xf32>
    %139 = arith.addf %136, %138 : vector<8x32xf32>
    %c3 = arith.constant 3 : index
    %c0_42 = arith.constant 0 : index
    %c0_43 = arith.constant 0 : index
    %140 = vector.load %arg3[%c3, %c0_42, %c0_43] : memref<5x2x32xf32, #tpu.memory_space<vmem>>, vector<1x2x32xf32>
    %141 = vector.shape_cast %140 : vector<1x2x32xf32> to vector<2x32xf32>
    %142 = arith.addf %123, %139 : vector<8x32xf32>
    %143 = vector.extract_strided_slice %141 {offsets = [0, 0], sizes = [1, 32], strides = [1, 1]} : vector<2x32xf32> to vector<1x32xf32>
    %144 = vector.extract_strided_slice %141 {offsets = [1, 0], sizes = [1, 32], strides = [1, 1]} : vector<2x32xf32> to vector<1x32xf32>
    %cst_44 = arith.constant dense<0.000000e+00> : vector<8xf32>
    %145 = vector.multi_reduction <add>, %142, %cst_44 [1] : vector<8x32xf32> to vector<8xf32>
    %146 = vector.shape_cast %145 : vector<8xf32> to vector<8x1xf32>
    %cst_45 = arith.constant 3.200000e+01 : f32
    %147 = vector.broadcast %cst_45 : f32 to vector<8x1xf32>
    %148 = arith.divf %146, %147 : vector<8x1xf32>
    %149 = arith.mulf %142, %142 : vector<8x32xf32>
    %cst_46 = arith.constant dense<0.000000e+00> : vector<8xf32>
    %150 = vector.multi_reduction <add>, %149, %cst_46 [1] : vector<8x32xf32> to vector<8xf32>
    %151 = vector.shape_cast %150 : vector<8xf32> to vector<8x1xf32>
    %cst_47 = arith.constant 3.200000e+01 : f32
    %152 = vector.broadcast %cst_47 : f32 to vector<8x1xf32>
    %153 = arith.divf %151, %152 : vector<8x1xf32>
    %154 = arith.mulf %148, %148 : vector<8x1xf32>
    %155 = arith.subf %153, %154 : vector<8x1xf32>
    %156 = vector.broadcast %148 : vector<8x1xf32> to vector<8x32xf32>
    %157 = arith.subf %142, %156 : vector<8x32xf32>
    %cst_48 = arith.constant 9.99999997E-7 : f32
    %158 = vector.broadcast %cst_48 : f32 to vector<8x1xf32>
    %159 = arith.addf %155, %158 : vector<8x1xf32>
    %160 = math.rsqrt %159 : vector<8x1xf32>
    %161 = vector.broadcast %160 : vector<8x1xf32> to vector<8x32xf32>
    %162 = arith.mulf %157, %161 : vector<8x32xf32>
    %163 = vector.broadcast %143 : vector<1x32xf32> to vector<8x32xf32>
    %164 = arith.mulf %162, %163 : vector<8x32xf32>
    %165 = vector.broadcast %144 : vector<1x32xf32> to vector<8x32xf32>
    %166 = arith.addf %164, %165 : vector<8x32xf32>
    %c1_49 = arith.constant 1 : index
    %c0_50 = arith.constant 0 : index
    %c0_51 = arith.constant 0 : index
    %167 = vector.load %arg4[%c1_49, %c0_50, %c0_51] : memref<2x32x192xf32, #tpu.memory_space<vmem>>, vector<1x32x192xf32>
    %168 = vector.shape_cast %167 : vector<1x32x192xf32> to vector<32x192xf32>
    %cst_52 = arith.constant dense<0.000000e+00> : vector<8x192xf32>
    %169 = tpu.matmul %166, %168, %cst_52 {dimension_numbers = #tpu.dot_dimension_numbers<[1], [0], [0], [1], [0, 0, 1, 1], [], []>} : vector<8x32xf32>, vector<32x192xf32>, vector<8x192xf32> -> vector<8x192xf32>
    %170 = vector.extract_strided_slice %169 {offsets = [0, 128], sizes = [8, 8], strides = [1, 1]} : vector<8x192xf32> to vector<8x8xf32>
    %171 = vector.extract_strided_slice %169 {offsets = [0, 136], sizes = [8, 8], strides = [1, 1]} : vector<8x192xf32> to vector<8x8xf32>
    %172 = vector.extract_strided_slice %169 {offsets = [0, 144], sizes = [8, 8], strides = [1, 1]} : vector<8x192xf32> to vector<8x8xf32>
    %173 = vector.extract_strided_slice %169 {offsets = [0, 152], sizes = [8, 8], strides = [1, 1]} : vector<8x192xf32> to vector<8x8xf32>
    %174 = vector.shape_cast %170 : vector<8x8xf32> to vector<1x8x8xf32>
    %175 = vector.shape_cast %171 : vector<8x8xf32> to vector<1x8x8xf32>
    %176 = vector.shape_cast %172 : vector<8x8xf32> to vector<1x8x8xf32>
    %177 = vector.shape_cast %173 : vector<8x8xf32> to vector<1x8x8xf32>
    %178 = tpu.concatenate %174, %175, %176, %177 in 0 : vector<1x8x8xf32>, vector<1x8x8xf32>, vector<1x8x8xf32>, vector<1x8x8xf32> -> vector<4x8x8xf32>
    %179 = vector.extract_strided_slice %169 {offsets = [0, 160], sizes = [8, 8], strides = [1, 1]} : vector<8x192xf32> to vector<8x8xf32>
    %180 = vector.extract_strided_slice %169 {offsets = [0, 168], sizes = [8, 8], strides = [1, 1]} : vector<8x192xf32> to vector<8x8xf32>
    %181 = vector.extract_strided_slice %169 {offsets = [0, 176], sizes = [8, 8], strides = [1, 1]} : vector<8x192xf32> to vector<8x8xf32>
    %182 = vector.extract_strided_slice %169 {offsets = [0, 184], sizes = [8, 8], strides = [1, 1]} : vector<8x192xf32> to vector<8x8xf32>
    %183 = vector.shape_cast %179 : vector<8x8xf32> to vector<1x8x8xf32>
    %184 = vector.shape_cast %180 : vector<8x8xf32> to vector<1x8x8xf32>
    %185 = vector.shape_cast %181 : vector<8x8xf32> to vector<1x8x8xf32>
    %186 = vector.shape_cast %182 : vector<8x8xf32> to vector<1x8x8xf32>
    %187 = tpu.concatenate %183, %184, %185, %186 in 0 : vector<1x8x8xf32>, vector<1x8x8xf32>, vector<1x8x8xf32>, vector<1x8x8xf32> -> vector<4x8x8xf32>
    %188 = vector.extract_strided_slice %169 {offsets = [0, 0], sizes = [8, 32], strides = [1, 1]} : vector<8x192xf32> to vector<8x32xf32>
    %189 = vector.extract_strided_slice %169 {offsets = [0, 32], sizes = [8, 32], strides = [1, 1]} : vector<8x192xf32> to vector<8x32xf32>
    %190 = vector.extract_strided_slice %169 {offsets = [0, 64], sizes = [8, 32], strides = [1, 1]} : vector<8x192xf32> to vector<8x32xf32>
    %191 = vector.extract_strided_slice %169 {offsets = [0, 96], sizes = [8, 32], strides = [1, 1]} : vector<8x192xf32> to vector<8x32xf32>
    %192 = vector.shape_cast %188 : vector<8x32xf32> to vector<1x8x32xf32>
    %193 = vector.shape_cast %189 : vector<8x32xf32> to vector<1x8x32xf32>
    %194 = vector.shape_cast %190 : vector<8x32xf32> to vector<1x8x32xf32>
    %195 = vector.shape_cast %191 : vector<8x32xf32> to vector<1x8x32xf32>
    %196 = tpu.concatenate %192, %193, %194, %195 in 0 : vector<1x8x32xf32>, vector<1x8x32xf32>, vector<1x8x32xf32>, vector<1x8x32xf32> -> vector<4x8x32xf32>
    "tpu.trace_start"() <{level = 10 : i32, message = "hqd,hkd->hqk"}> : () -> ()
    %cst_53 = arith.constant dense<0.000000e+00> : vector<4x8x8xf32>
    %197 = tpu.matmul %178, %187, %cst_53 {dimension_numbers = #tpu.dot_dimension_numbers<[2], [2], [1], [1], [0, 0, 0, 1, 1, 1], [0], [0]>} : vector<4x8x8xf32>, vector<4x8x8xf32>, vector<4x8x8xf32> -> vector<4x8x8xf32>
    "tpu.trace_stop"() : () -> ()
    %cst_54 = arith.constant 0.353553385 : f32
    %198 = vector.broadcast %cst_54 : f32 to vector<4x8x8xf32>
    %199 = arith.mulf %197, %198 : vector<4x8x8xf32>
    %200 = vector.shape_cast %12 : vector<8x8xf32> to vector<1x8x8xf32>
    %201 = vector.broadcast %200 : vector<1x8x8xf32> to vector<4x8x8xf32>
    %202 = arith.addf %199, %201 : vector<4x8x8xf32>
    %cst_55 = arith.constant dense<0xFF800000> : vector<4x8xf32>
    %203 = vector.multi_reduction <maximumf>, %202, %cst_55 [2] : vector<4x8x8xf32> to vector<4x8xf32>
    %204 = vector.shape_cast %203 : vector<4x8xf32> to vector<4x8x1xf32>
    %205 = vector.broadcast %204 : vector<4x8x1xf32> to vector<4x8x8xf32>
    %206 = arith.subf %202, %205 : vector<4x8x8xf32>
    %207 = math.exp %206 : vector<4x8x8xf32>
    %cst_56 = arith.constant dense<0.000000e+00> : vector<4x8xf32>
    %208 = vector.multi_reduction <add>, %207, %cst_56 [2] : vector<4x8x8xf32> to vector<4x8xf32>
    %209 = vector.shape_cast %208 : vector<4x8xf32> to vector<4x8x1xf32>
    %210 = tpu.reciprocal %209 {approx = true} : vector<4x8x1xf32> -> vector<4x8x1xf32>
    %211 = vector.broadcast %210 : vector<4x8x1xf32> to vector<4x8x8xf32>
    %212 = arith.mulf %207, %211 : vector<4x8x8xf32>
    "tpu.trace_start"() <{level = 10 : i32, message = "hqk,hkd->hqd"}> : () -> ()
    %cst_57 = arith.constant dense<0.000000e+00> : vector<4x8x32xf32>
    %213 = tpu.matmul %212, %196, %cst_57 {dimension_numbers = #tpu.dot_dimension_numbers<[2], [1], [1], [2], [0, 0, 0, 1, 1, 2], [0], [0]>} : vector<4x8x8xf32>, vector<4x8x32xf32>, vector<4x8x32xf32> -> vector<4x8x32xf32>
    "tpu.trace_stop"() : () -> ()
    %214 = vector.extract_strided_slice %213 {offsets = [0, 0, 0], sizes = [1, 8, 32], strides = [1, 1, 1]} : vector<4x8x32xf32> to vector<1x8x32xf32>
    %215 = vector.shape_cast %214 : vector<1x8x32xf32> to vector<8x32xf32>
    %216 = vector.extract_strided_slice %213 {offsets = [1, 0, 0], sizes = [1, 8, 32], strides = [1, 1, 1]} : vector<4x8x32xf32> to vector<1x8x32xf32>
    %217 = vector.shape_cast %216 : vector<1x8x32xf32> to vector<8x32xf32>
    %218 = arith.addf %215, %217 : vector<8x32xf32>
    %219 = vector.extract_strided_slice %213 {offsets = [2, 0, 0], sizes = [1, 8, 32], strides = [1, 1, 1]} : vector<4x8x32xf32> to vector<1x8x32xf32>
    %220 = vector.shape_cast %219 : vector<1x8x32xf32> to vector<8x32xf32>
    %221 = arith.addf %218, %220 : vector<8x32xf32>
    %222 = vector.extract_strided_slice %213 {offsets = [3, 0, 0], sizes = [1, 8, 32], strides = [1, 1, 1]} : vector<4x8x32xf32> to vector<1x8x32xf32>
    %223 = vector.shape_cast %222 : vector<1x8x32xf32> to vector<8x32xf32>
    %224 = arith.addf %221, %223 : vector<8x32xf32>
    %c2 = arith.constant 2 : index
    %c0_58 = arith.constant 0 : index
    %c0_59 = arith.constant 0 : index
    %225 = vector.load %arg3[%c2, %c0_58, %c0_59] : memref<5x2x32xf32, #tpu.memory_space<vmem>>, vector<1x2x32xf32>
    %226 = vector.shape_cast %225 : vector<1x2x32xf32> to vector<2x32xf32>
    %227 = arith.addf %166, %224 : vector<8x32xf32>
    %228 = vector.extract_strided_slice %226 {offsets = [0, 0], sizes = [1, 32], strides = [1, 1]} : vector<2x32xf32> to vector<1x32xf32>
    %229 = vector.extract_strided_slice %226 {offsets = [1, 0], sizes = [1, 32], strides = [1, 1]} : vector<2x32xf32> to vector<1x32xf32>
    %cst_60 = arith.constant dense<0.000000e+00> : vector<8xf32>
    %230 = vector.multi_reduction <add>, %227, %cst_60 [1] : vector<8x32xf32> to vector<8xf32>
    %231 = vector.shape_cast %230 : vector<8xf32> to vector<8x1xf32>
    %cst_61 = arith.constant 3.200000e+01 : f32
    %232 = vector.broadcast %cst_61 : f32 to vector<8x1xf32>
    %233 = arith.divf %231, %232 : vector<8x1xf32>
    %234 = arith.mulf %227, %227 : vector<8x32xf32>
    %cst_62 = arith.constant dense<0.000000e+00> : vector<8xf32>
    %235 = vector.multi_reduction <add>, %234, %cst_62 [1] : vector<8x32xf32> to vector<8xf32>
    %236 = vector.shape_cast %235 : vector<8xf32> to vector<8x1xf32>
    %cst_63 = arith.constant 3.200000e+01 : f32
    %237 = vector.broadcast %cst_63 : f32 to vector<8x1xf32>
    %238 = arith.divf %236, %237 : vector<8x1xf32>
    %239 = arith.mulf %233, %233 : vector<8x1xf32>
    %240 = arith.subf %238, %239 : vector<8x1xf32>
    %241 = vector.broadcast %233 : vector<8x1xf32> to vector<8x32xf32>
    %242 = arith.subf %227, %241 : vector<8x32xf32>
    %cst_64 = arith.constant 9.99999997E-7 : f32
    %243 = vector.broadcast %cst_64 : f32 to vector<8x1xf32>
    %244 = arith.addf %240, %243 : vector<8x1xf32>
    %245 = math.rsqrt %244 : vector<8x1xf32>
    %246 = vector.broadcast %245 : vector<8x1xf32> to vector<8x32xf32>
    %247 = arith.mulf %242, %246 : vector<8x32xf32>
    %248 = vector.broadcast %228 : vector<1x32xf32> to vector<8x32xf32>
    %249 = arith.mulf %247, %248 : vector<8x32xf32>
    %250 = vector.broadcast %229 : vector<1x32xf32> to vector<8x32xf32>
    %251 = arith.addf %249, %250 : vector<8x32xf32>
    %c1_65 = arith.constant 1 : index
    %c0_66 = arith.constant 0 : index
    %c0_67 = arith.constant 0 : index
    %252 = vector.load %arg6[%c1_65, %c0_66, %c0_67] : memref<2x2x64xf32, #tpu.memory_space<vmem>>, vector<1x2x64xf32>
    %253 = vector.shape_cast %252 : vector<1x2x64xf32> to vector<2x64xf32>
    %c1_68 = arith.constant 1 : index
    %c0_69 = arith.constant 0 : index
    %c0_70 = arith.constant 0 : index
    %254 = vector.load %arg5[%c1_68, %c0_69, %c0_70] : memref<2x32x64xf32, #tpu.memory_space<vmem>>, vector<1x32x64xf32>
    %255 = vector.shape_cast %254 : vector<1x32x64xf32> to vector<32x64xf32>
    %cst_71 = arith.constant dense<0.000000e+00> : vector<8x64xf32>
    %256 = tpu.matmul %251, %255, %cst_71 {dimension_numbers = #tpu.dot_dimension_numbers<[1], [0], [0], [1], [0, 0, 1, 1], [], []>} : vector<8x32xf32>, vector<32x64xf32>, vector<8x64xf32> -> vector<8x64xf32>
    %257 = vector.extract_strided_slice %253 {offsets = [0, 0], sizes = [1, 64], strides = [1, 1]} : vector<2x64xf32> to vector<1x64xf32>
    %258 = vector.broadcast %257 : vector<1x64xf32> to vector<8x64xf32>
    %259 = arith.addf %256, %258 : vector<8x64xf32>
    %cst_72 = arith.constant 0.000000e+00 : f32
    %260 = vector.broadcast %cst_72 : f32 to vector<8x64xf32>
    %261 = arith.maximumf %259, %260 : vector<8x64xf32>
    %c1_73 = arith.constant 1 : index
    %c0_74 = arith.constant 0 : index
    %c0_75 = arith.constant 0 : index
    %262 = vector.load %arg7[%c1_73, %c0_74, %c0_75] : memref<2x64x32xf32, #tpu.memory_space<vmem>>, vector<1x64x32xf32>
    %263 = vector.shape_cast %262 : vector<1x64x32xf32> to vector<64x32xf32>
    %cst_76 = arith.constant dense<0.000000e+00> : vector<8x32xf32>
    %264 = tpu.matmul %261, %263, %cst_76 {dimension_numbers = #tpu.dot_dimension_numbers<[1], [0], [0], [1], [0, 0, 1, 1], [], []>} : vector<8x64xf32>, vector<64x32xf32>, vector<8x32xf32> -> vector<8x32xf32>
    %265 = vector.extract_strided_slice %253 {offsets = [1, 0], sizes = [1, 32], strides = [1, 1]} : vector<2x64xf32> to vector<1x32xf32>
    %266 = vector.broadcast %265 : vector<1x32xf32> to vector<8x32xf32>
    %267 = arith.addf %264, %266 : vector<8x32xf32>
    %c4 = arith.constant 4 : index
    %c0_77 = arith.constant 0 : index
    %c0_78 = arith.constant 0 : index
    %268 = vector.load %arg3[%c4, %c0_77, %c0_78] : memref<5x2x32xf32, #tpu.memory_space<vmem>>, vector<1x2x32xf32>
    %269 = vector.shape_cast %268 : vector<1x2x32xf32> to vector<2x32xf32>
    %270 = arith.addf %251, %267 : vector<8x32xf32>
    %271 = vector.extract_strided_slice %269 {offsets = [0, 0], sizes = [1, 32], strides = [1, 1]} : vector<2x32xf32> to vector<1x32xf32>
    %272 = vector.extract_strided_slice %269 {offsets = [1, 0], sizes = [1, 32], strides = [1, 1]} : vector<2x32xf32> to vector<1x32xf32>
    %cst_79 = arith.constant dense<0.000000e+00> : vector<8xf32>
    %273 = vector.multi_reduction <add>, %270, %cst_79 [1] : vector<8x32xf32> to vector<8xf32>
    %274 = vector.shape_cast %273 : vector<8xf32> to vector<8x1xf32>
    %cst_80 = arith.constant 3.200000e+01 : f32
    %275 = vector.broadcast %cst_80 : f32 to vector<8x1xf32>
    %276 = arith.divf %274, %275 : vector<8x1xf32>
    %277 = arith.mulf %270, %270 : vector<8x32xf32>
    %cst_81 = arith.constant dense<0.000000e+00> : vector<8xf32>
    %278 = vector.multi_reduction <add>, %277, %cst_81 [1] : vector<8x32xf32> to vector<8xf32>
    %279 = vector.shape_cast %278 : vector<8xf32> to vector<8x1xf32>
    %cst_82 = arith.constant 3.200000e+01 : f32
    %280 = vector.broadcast %cst_82 : f32 to vector<8x1xf32>
    %281 = arith.divf %279, %280 : vector<8x1xf32>
    %282 = arith.mulf %276, %276 : vector<8x1xf32>
    %283 = arith.subf %281, %282 : vector<8x1xf32>
    %284 = vector.broadcast %276 : vector<8x1xf32> to vector<8x32xf32>
    %285 = arith.subf %270, %284 : vector<8x32xf32>
    %cst_83 = arith.constant 9.99999997E-7 : f32
    %286 = vector.broadcast %cst_83 : f32 to vector<8x1xf32>
    %287 = arith.addf %283, %286 : vector<8x1xf32>
    %288 = math.rsqrt %287 : vector<8x1xf32>
    %289 = vector.broadcast %288 : vector<8x1xf32> to vector<8x32xf32>
    %290 = arith.mulf %285, %289 : vector<8x32xf32>
    %291 = vector.broadcast %271 : vector<1x32xf32> to vector<8x32xf32>
    %292 = arith.mulf %290, %291 : vector<8x32xf32>
    %293 = vector.broadcast %272 : vector<1x32xf32> to vector<8x32xf32>
    %294 = arith.addf %292, %293 : vector<8x32xf32>
    %c0_84 = arith.constant 0 : index
    %c0_85 = arith.constant 0 : index
    %295 = vector.load %arg8[%c0_84, %c0_85] : memref<32x128xf32, #tpu.memory_space<vmem>>, vector<32x128xf32>
    %cst_86 = arith.constant dense<0.000000e+00> : vector<8x128xf32>
    %296 = tpu.matmul %294, %295, %cst_86 {dimension_numbers = #tpu.dot_dimension_numbers<[1], [0], [0], [1], [0, 0, 1, 1], [], []>} : vector<8x32xf32>, vector<32x128xf32>, vector<8x128xf32> -> vector<8x128xf32>
    %c0_87 = arith.constant 0 : index
    %c0_88 = arith.constant 0 : index
    %297 = vector.load %arg9[%c0_87, %c0_88] : memref<8x128xf32, #tpu.memory_space<vmem>>, vector<8x128xf32>
    tpu.vector_store %arg9[%c0_87, %c0_88], %296 {strides = array<i32>} : memref<8x128xf32, #tpu.memory_space<vmem>>, vector<8x128xf32>,
    return
  }
  func.func @transform_0(%arg0: i32) -> (i32, i32, i32) {
    %c0_i32 = arith.constant 0 : i32
    %c0_i32_0 = arith.constant 0 : i32
    %c0_i32_1 = arith.constant 0 : i32
    return %arg0, %c0_i32, %c0_i32_0 : i32, i32, i32
  }
  func.func @transform_1(%arg0: i32) -> (i32, i32) {
    %c0_i32 = arith.constant 0 : i32
    %c0_i32_0 = arith.constant 0 : i32
    return %arg0, %c0_i32 : i32, i32
  }
  func.func @transform_2(%arg0: i32) -> (i32, i32, i32) {
    %c0_i32 = arith.constant 0 : i32
    %c0_i32_0 = arith.constant 0 : i32
    %c0_i32_1 = arith.constant 0 : i32
    %c0_i32_2 = arith.constant 0 : i32
    return %c0_i32, %c0_i32_0, %c0_i32_1 : i32, i32, i32
  }
  func.func @transform_3(%arg0: i32) -> (i32, i32, i32) {
    %c0_i32 = arith.constant 0 : i32
    %c0_i32_0 = arith.constant 0 : i32
    %c0_i32_1 = arith.constant 0 : i32
    %c0_i32_2 = arith.constant 0 : i32
    return %c0_i32, %c0_i32_0, %c0_i32_1 : i32, i32, i32
  }
  func.func @transform_4(%arg0: i32) -> (i32, i32, i32) {
    %c0_i32 = arith.constant 0 : i32
    %c0_i32_0 = arith.constant 0 : i32
    %c0_i32_1 = arith.constant 0 : i32
    %c0_i32_2 = arith.constant 0 : i32
    return %c0_i32, %c0_i32_0, %c0_i32_1 : i32, i32, i32
  }
  func.func @transform_5(%arg0: i32) -> (i32, i32, i32) {
    %c0_i32 = arith.constant 0 : i32
    %c0_i32_0 = arith.constant 0 : i32
    %c0_i32_1 = arith.constant 0 : i32
    %c0_i32_2 = arith.constant 0 : i32
    return %c0_i32, %c0_i32_0, %c0_i32_1 : i32, i32, i32
  }
  func.func @transform_6(%arg0: i32) -> (i32, i32, i32) {
    %c0_i32 = arith.constant 0 : i32
    %c0_i32_0 = arith.constant 0 : i32
    %c0_i32_1 = arith.constant 0 : i32
    %c0_i32_2 = arith.constant 0 : i32
    return %c0_i32, %c0_i32_0, %c0_i32_1 : i32, i32, i32
  }
  func.func @transform_7(%arg0: i32) -> (i32, i32) {
    %c0_i32 = arith.constant 0 : i32
    %c0_i32_0 = arith.constant 0 : i32
    %c0_i32_1 = arith.constant 0 : i32
    return %c0_i32, %c0_i32_0 : i32, i32
  }
  func.func @transform_8(%arg0: i32) -> (i32, i32) {
    %c0_i32 = arith.constant 0 : i32
    %c0_i32_0 = arith.constant 0 : i32
    return %arg0, %c0_i32 : i32, i32
  }
}

</mosaic_0001>

<llo_original>
// kernel: tpu_custom_call.1
$region0: #{tpu_custom_call.1}
  #allocation0 [shape = 'u32[]', space=smem, size = 0x4, offset = 0x4, fixed_abs, tag = 'smem constant byte address 0x4 - core index']
  #allocation1 [shape = 'u32[72,128]{1,0:T(1,128)}', space=vmem, size = 0x9000, scoped, tag = 'internal scratch']
  %s0 = inlined_call_operand.vmem [shape: f32[2,1,8], index: 0, kind: input, shape index: {}]
  %s1 = inlined_call_operand.hbm [shape: f32[16,32], index: 1, kind: input, shape index: {}]
  %s2 = inlined_call_operand.hbm [shape: f32[5,2,32], index: 2, kind: input, shape index: {}]
  %s3 = inlined_call_operand.vmem [shape: f32[2,32,192], index: 3, kind: input, shape index: {}]
  %s4 = inlined_call_operand.vmem [shape: f32[2,32,64], index: 4, kind: input, shape index: {}]
  %s5 = inlined_call_operand.hbm [shape: f32[2,2,64], index: 5, kind: input, shape index: {}]
  %s6 = inlined_call_operand.vmem [shape: f32[2,64,32], index: 6, kind: input, shape index: {}]
  %s7 = inlined_call_operand.hbm [shape: f32[32,128], index: 7, kind: input, shape index: {}]
  %s8 = inlined_call_operand.hbm [shape: f32[16,128], index: 8, kind: output, shape index: {}]
  %s9 = sld [smem:[#allocation0]]
  $region81: #{tpu_custom_call.1} parent=0
    _
  %s11 = ssub.s32 1, %s9
  %s12 = scalar_select 0, %s11, %s9
  $region1: #{tpu_custom_call.1} parent=0
    #allocation2 [shape = 'u8[8192]{0}', space=vmem, size = 0x2000, scoped, tag = 'input window, operand 1']
    #allocation3 [shape = 's32[2]{0}', space=sflag, size = 0x8, scoped, tag = 'scoped memory for tpu_custom_call.1']
    #allocation4 [shape = 's32[2]{0}', space=sflag, size = 0x8, scoped, tag = 'scoped memory for tpu_custom_call.1']
    #allocation5 [shape = 'u8[5120]{0}', space=vmem, size = 0x1400, scoped, tag = 'input window, operand 2, single buffered']
    #allocation6 [shape = 's32[1]{0}', space=sflag, size = 0x4, scoped, tag = 'scoped memory for tpu_custom_call.1']
    #allocation7 [shape = 'u8[2048]{0}', space=vmem, size = 0x800, scoped, tag = 'input window, operand 5, single buffered']
    #allocation8 [shape = 'u8[16384]{0}', space=vmem, size = 0x4000, scoped, tag = 'input window, operand 7, single buffered']
    #allocation9 [shape = 's32[1]{0}', space=sflag, size = 0x4, scoped, tag = 'scoped memory for tpu_custom_call.1']
    #allocation10 [shape = 'u8[8192]{0}', space=vmem, size = 0x2000, scoped, tag = 'output window, operand 0']
    %13 = vsyncpa [#allocation3], 0
    %s14 = scalar_lea.sflag [#allocation3], 1
    %15 = vsyncpa %s14, 0
    %16 = vsyncpa [#allocation6], 0
    %17 = vsyncpa [#allocation9], 0
    %18 = vsyncpa [#allocation4], 0
    %s19 = scalar_lea.sflag [#allocation4], 1
    %20 = vsyncpa %s19, 0
    loop: start=0, step=1, limit=4
    $region2: #{tpu_custom_call.1} parent=1 // loop_pre_header
      _
    $region3: #{tpu_custom_call.1} parent=1 // loop_header
      %s22 = sphi 0, %s26
      %p23 = scmp.ge.s32.totalorder %s22, 4
      %s32 = sphi 0, %s34
      %s35 = sphi 0, %s32
      %s36 = sphi 0, %s35
      %s52 = sphi 0, %s36
      %s58 = sphi 0, %s60
      %s61 = sphi 0, %s58
      %s62 = sphi 0, %s61
      %s78 = sphi 0, %s62
      %s82 = sphi 0, %s82
      %s84 = sphi 0, %s82
      %s85 = sphi 0, %s84
      %s99 = sphi 0, %s85
      %s103 = sphi 0, %s103
      %s105 = sphi 0, %s103
      %s106 = sphi 0, %s105
      %s120 = sphi 0, %s106
      %s124 = sphi 0, %s124
      %s126 = sphi 0, %s124
      %s127 = sphi 0, %s126
      %s141 = sphi 0, %s127
      %s145 = sphi 0, %s145
      %s147 = sphi 0, %s145
      %s148 = sphi 0, %s147
      %s162 = sphi 0, %s148
      %s166 = sphi 0, %s166
      %s168 = sphi 0, %s166
      %s169 = sphi 0, %s168
      %s183 = sphi 0, %s169
      %s187 = sphi 0, %s187
      %s189 = sphi 0, %s187
      %s190 = sphi 0, %s189
      %s204 = sphi 0, %s190
      %s210 = sphi 0, %s212
      %s213 = sphi 0, %s210
      %s214 = sphi 0, %s213
      %s230 = sphi 0, %s214
    $region4: #{tpu_custom_call.1} parent=1 // loop_header_branch
      %25 = sbr.rel (%p23) target = $region8
    $region5: #{tpu_custom_call.1} parent=1 // loop_body
      %s27 = ssub.s32 %s22, 1
      %s28 = ssub.s32 %s22, 2
      %s29 = sadd.s32 %s22, 1
      %s30 = ssub.s32 %s22, %s29
      %p31 = scmp.eq.s32.totalorder %s30, 0
      %s33 = sadd.s32 %s32, 1
      %s34 = scalar_select %p31, %s32, %s33
      %p37 = pneg %p31
      %p38 = scmp.eq.s32.totalorder %s22, 1
      %p39 = por %p37, %p38
      %p40 = scmp.ne.s32.totalorder %s32, %s35
      %p41 = scmp.eq.s32.totalorder %s22, 0
      %p42 = por %p40, %p41
      %p43 = scmp.ne.s32.totalorder %s32, %s35
      %p44 = scmp.eq.s32.totalorder %s27, 1
      %p45 = por %p43, %p44
      %p46 = scmp.ne.s32.totalorder %s35, %s36
      %p47 = scmp.eq.s32.totalorder %s27, 0
      %p48 = por %p46, %p47
      %p49 = scmp.ne.s32.totalorder %s35, %s36
      %p50 = scmp.eq.s32.totalorder %s28, 1
      %p51 = por %p49, %p50
      %p53 = scmp.ne.s32.totalorder %s36, %s52
      %p54 = scmp.eq.s32.totalorder %s28, 0
      %p55 = por %p53, %p54
      %s56 = ssub.s32 %s22, %s29
      %p57 = scmp.eq.s32.totalorder %s56, 0
      %s59 = sadd.s32 %s58, 1
      %s60 = scalar_select %p57, %s58, %s59
      %p63 = pneg %p57
      %p64 = scmp.eq.s32.totalorder %s22, 1
      %p65 = por %p63, %p64
      %p66 = scmp.ne.s32.totalorder %s58, %s61
      %p67 = scmp.eq.s32.totalorder %s22, 0
      %p68 = por %p66, %p67
      %p69 = scmp.ne.s32.totalorder %s58, %s61
      %p70 = scmp.eq.s32.totalorder %s27, 1
      %p71 = por %p69, %p70
      %p72 = scmp.ne.s32.totalorder %s61, %s62
      %p73 = scmp.eq.s32.totalorder %s27, 0
      %p74 = por %p72, %p73
      %p75 = scmp.ne.s32.totalorder %s61, %s62
      %p76 = scmp.eq.s32.totalorder %s28, 1
      %p77 = por %p75, %p76
      %p79 = scmp.ne.s32.totalorder %s62, %s78
      %p80 = scmp.eq.s32.totalorder %s28, 0
      %p81 = por %p79, %p80
      %s83 = sadd.s32 %s82, 1
      %p86 = scmp.eq.s32.totalorder %s22, 1
      %p87 = scmp.ne.s32.totalorder %s82, %s84
      %p88 = scmp.eq.s32.totalorder %s22, 0
      %p89 = por %p87, %p88
      %p90 = scmp.ne.s32.totalorder %s82, %s84
      %p91 = scmp.eq.s32.totalorder %s27, 1
      %p92 = por %p90, %p91
      %p93 = scmp.ne.s32.totalorder %s84, %s85
      %p94 = scmp.eq.s32.totalorder %s27, 0
      %p95 = por %p93, %p94
      %p96 = scmp.ne.s32.totalorder %s84, %s85
      %p97 = scmp.eq.s32.totalorder %s28, 1
      %p98 = por %p96, %p97
      %p100 = scmp.ne.s32.totalorder %s85, %s99
      %p101 = scmp.eq.s32.totalorder %s28, 0
      %p102 = por %p100, %p101
      %s104 = sadd.s32 %s103, 1
      %p107 = scmp.eq.s32.totalorder %s22, 1
      %p108 = scmp.ne.s32.totalorder %s103, %s105
      %p109 = scmp.eq.s32.totalorder %s22, 0
      %p110 = por %p108, %p109
      %p111 = scmp.ne.s32.totalorder %s103, %s105
      %p112 = scmp.eq.s32.totalorder %s27, 1
      %p113 = por %p111, %p112
      %p114 = scmp.ne.s32.totalorder %s105, %s106
      %p115 = scmp.eq.s32.totalorder %s27, 0
      %p116 = por %p114, %p115
      %p117 = scmp.ne.s32.totalorder %s105, %s106
      %p118 = scmp.eq.s32.totalorder %s28, 1
      %p119 = por %p117, %p118
      %p121 = scmp.ne.s32.totalorder %s106, %s120
      %p122 = scmp.eq.s32.totalorder %s28, 0
      %p123 = por %p121, %p122
      %s125 = sadd.s32 %s124, 1
      %p128 = scmp.eq.s32.totalorder %s22, 1
      %p129 = scmp.ne.s32.totalorder %s124, %s126
      %p130 = scmp.eq.s32.totalorder %s22, 0
      %p131 = por %p129, %p130
      %p132 = scmp.ne.s32.totalorder %s124, %s126
      %p133 = scmp.eq.s32.totalorder %s27, 1
      %p134 = por %p132, %p133
      %p135 = scmp.ne.s32.totalorder %s126, %s127
      %p136 = scmp.eq.s32.totalorder %s27, 0
      %p137 = por %p135, %p136
      %p138 = scmp.ne.s32.totalorder %s126, %s127
      %p139 = scmp.eq.s32.totalorder %s28, 1
      %p140 = por %p138, %p139
      %p142 = scmp.ne.s32.totalorder %s127, %s141
      %p143 = scmp.eq.s32.totalorder %s28, 0
      %p144 = por %p142, %p143
      %s146 = sadd.s32 %s145, 1
      %p149 = scmp.eq.s32.totalorder %s22, 1
      %p150 = scmp.ne.s32.totalorder %s145, %s147
      %p151 = scmp.eq.s32.totalorder %s22, 0
      %p152 = por %p150, %p151
      %p153 = scmp.ne.s32.totalorder %s145, %s147
      %p154 = scmp.eq.s32.totalorder %s27, 1
      %p155 = por %p153, %p154
      %p156 = scmp.ne.s32.totalorder %s147, %s148
      %p157 = scmp.eq.s32.totalorder %s27, 0
      %p158 = por %p156, %p157
      %p159 = scmp.ne.s32.totalorder %s147, %s148
      %p160 = scmp.eq.s32.totalorder %s28, 1
      %p161 = por %p159, %p160
      %p163 = scmp.ne.s32.totalorder %s148, %s162
      %p164 = scmp.eq.s32.totalorder %s28, 0
      %p165 = por %p163, %p164
      %s167 = sadd.s32 %s166, 1
      %p170 = scmp.eq.s32.totalorder %s22, 1
      %p171 = scmp.ne.s32.totalorder %s166, %s168
      %p172 = scmp.eq.s32.totalorder %s22, 0
      %p173 = por %p171, %p172
      %p174 = scmp.ne.s32.totalorder %s166, %s168
      %p175 = scmp.eq.s32.totalorder %s27, 1
      %p176 = por %p174, %p175
      %p177 = scmp.ne.s32.totalorder %s168, %s169
      %p178 = scmp.eq.s32.totalorder %s27, 0
      %p179 = por %p177, %p178
      %p180 = scmp.ne.s32.totalorder %s168, %s169
      %p181 = scmp.eq.s32.totalorder %s28, 1
      %p182 = por %p180, %p181
      %p184 = scmp.ne.s32.totalorder %s169, %s183
      %p185 = scmp.eq.s32.totalorder %s28, 0
      %p186 = por %p184, %p185
      %s188 = sadd.s32 %s187, 1
      %p191 = scmp.eq.s32.totalorder %s22, 1
      %p192 = scmp.ne.s32.totalorder %s187, %s189
      %p193 = scmp.eq.s32.totalorder %s22, 0
      %p194 = por %p192, %p193
      %p195 = scmp.ne.s32.totalorder %s187, %s189
      %p196 = scmp.eq.s32.totalorder %s27, 1
      %p197 = por %p195, %p196
      %p198 = scmp.ne.s32.totalorder %s189, %s190
      %p199 = scmp.eq.s32.totalorder %s27, 0
      %p200 = por %p198, %p199
      %p201 = scmp.ne.s32.totalorder %s189, %s190
      %p202 = scmp.eq.s32.totalorder %s28, 1
      %p203 = por %p201, %p202
      %p205 = scmp.ne.s32.totalorder %s190, %s204
      %p206 = scmp.eq.s32.totalorder %s28, 0
      %p207 = por %p205, %p206
      %s208 = ssub.s32 %s22, %s29
      %p209 = scmp.eq.s32.totalorder %s208, 0
      %s211 = sadd.s32 %s210, 1
      %s212 = scalar_select %p209, %s210, %s211
      %p215 = pneg %p209
      %p216 = scmp.eq.s32.totalorder %s22, 1
      %p217 = por %p215, %p216
      %p218 = scmp.ne.s32.totalorder %s210, %s213
      %p219 = scmp.eq.s32.totalorder %s22, 0
      %p220 = por %p218, %p219
      %p221 = scmp.ne.s32.totalorder %s210, %s213
      %p222 = scmp.eq.s32.totalorder %s27, 1
      %p223 = por %p221, %p222
      %p224 = scmp.ne.s32.totalorder %s213, %s214
      %p225 = scmp.eq.s32.totalorder %s27, 0
      %p226 = por %p224, %p225
      %p227 = scmp.ne.s32.totalorder %s213, %s214
      %p228 = scmp.eq.s32.totalorder %s28, 1
      %p229 = por %p227, %p228
      %p231 = scmp.ne.s32.totalorder %s214, %s230
      %p232 = scmp.eq.s32.totalorder %s28, 0
      %p233 = por %p231, %p232
      %p234 = scmp.le.s32.totalorder 1, %s22
      %p235 = scmp.lt.s32.totalorder %s22, 3
      %p236 = pnand %p234, %p235
      %p237 = pneg %p236
      // Predicated region
      $region9: #{tpu_custom_call.1} parent=5 // pred_check
        _
      $region10: #{tpu_custom_call.1} parent=5 // pred_check_branch
        %239 = sbr.rel (%p236) target = $region12
      $region11: #{tpu_custom_call.1} parent=5 // pred_region
        %s240 = ssub.s32 %s22, 1
        // Predicated region
        $region13: #{tpu_custom_call.1} parent=11 // pred_check
          %p241 = pneg %p95
        $region14: #{tpu_custom_call.1} parent=11 // pred_check_branch
          %243 = sbr.rel (%p241) target = $region16
        $region15: #{tpu_custom_call.1} parent=11 // pred_region
          %245 = vsyncadd [#allocation6], 0
          %s246 = sshll.u32 %s2, 4
          %s247 = int_to_ptr.hbm [resolvable:$true] %s246
          %s248 = sshll.u32 [#allocation5], 4
          %s249 = int_to_ptr.vmem [resolvable:$true] %s248
          %254 = dma.hbm_to_vmem [thread:$0]  %s247, 160, %s249, [#allocation6], 32, 32, 2
        $region16: #{tpu_custom_call.1} parent=11 // pred_fallthru
          _
        // Predicated region
        $region17: #{tpu_custom_call.1} parent=11 // pred_check
          %p255 = pneg %p116
        $region18: #{tpu_custom_call.1} parent=11 // pred_check_branch
          %257 = sbr.rel (%p255) target = $region20
        $region19: #{tpu_custom_call.1} parent=11 // pred_region
          _
        $region20: #{tpu_custom_call.1} parent=11 // pred_fallthru
          _
        // Predicated region
        $region21: #{tpu_custom_call.1} parent=11 // pred_check
          %p258 = pneg %p137
        $region22: #{tpu_custom_call.1} parent=11 // pred_check_branch
          %260 = sbr.rel (%p258) target = $region24
        $region23: #{tpu_custom_call.1} parent=11 // pred_region
          _
        $region24: #{tpu_custom_call.1} parent=11 // pred_fallthru
          _
        // Predicated region
        $region25: #{tpu_custom_call.1} parent=11 // pred_check
          %p261 = pneg %p158
        $region26: #{tpu_custom_call.1} parent=11 // pred_check_branch
          %263 = sbr.rel (%p261) target = $region28
        $region27: #{tpu_custom_call.1} parent=11 // pred_region
          %265 = vsyncadd [#allocation6], 0
          %s266 = sshll.u32 %s5, 4
          %s267 = int_to_ptr.hbm [resolvable:$true] %s266
          %s268 = sshll.u32 [#allocation7], 4
          %s269 = int_to_ptr.vmem [resolvable:$true] %s268
          %274 = dma.hbm_to_vmem [thread:$0]  %s267, 64, %s269, [#allocation6], 32, 32, 2
        $region28: #{tpu_custom_call.1} parent=11 // pred_fallthru
          _
        // Predicated region
        $region29: #{tpu_custom_call.1} parent=11 // pred_check
          %p275 = pneg %p179
        $region30: #{tpu_custom_call.1} parent=11 // pred_check_branch
          %277 = sbr.rel (%p275) target = $region32
        $region31: #{tpu_custom_call.1} parent=11 // pred_region
          _
        $region32: #{tpu_custom_call.1} parent=11 // pred_fallthru
          _
        // Predicated region
        $region33: #{tpu_custom_call.1} parent=11 // pred_check
          %p278 = pneg %p200
        $region34: #{tpu_custom_call.1} parent=11 // pred_check_branch
          %280 = sbr.rel (%p278) target = $region36
        $region35: #{tpu_custom_call.1} parent=11 // pred_region
          %282 = vsyncadd [#allocation9], 0
          %s283 = sshll.u32 %s7, 4
          %s284 = int_to_ptr.hbm [resolvable:$true] %s283
          %s285 = sshll.u32 [#allocation8], 4
          %s286 = int_to_ptr.vmem [resolvable:$true] %s285
          %291 = dma.hbm_to_vmem [thread:$0]  %s284, 512, %s286, [#allocation9], 128, 128, 8
        $region36: #{tpu_custom_call.1} parent=11 // pred_fallthru
          _
      $region12: #{tpu_custom_call.1} parent=5 // pred_fallthru
        _
      %p292 = scmp.lt.s32.totalorder %s22, 2
      // Predicated region
      $region37: #{tpu_custom_call.1} parent=5 // pred_check
        %p293 = pneg %p292
      $region38: #{tpu_custom_call.1} parent=5 // pred_check_branch
        %295 = sbr.rel (%p293) target = $region40
      $region39: #{tpu_custom_call.1} parent=5 // pred_region
        // Predicated region
        $region41: #{tpu_custom_call.1} parent=39 // pred_check
          %p296 = pneg %p42
        $region42: #{tpu_custom_call.1} parent=39 // pred_check_branch
          %298 = sbr.rel (%p296) target = $region44
        $region43: #{tpu_custom_call.1} parent=39 // pred_region
          %p299 = scmp.lt.s32.totalorder %s22, 1
          %s300 = scalar_select %p299, %s22, 1
          %s301 = scalar_lea.vmem %s0, %s300
        $region44: #{tpu_custom_call.1} parent=39 // pred_fallthru
          _
        // Predicated region
        $region45: #{tpu_custom_call.1} parent=39 // pred_check
          %p302 = pneg %p68
        $region46: #{tpu_custom_call.1} parent=39 // pred_check_branch
          %304 = sbr.rel (%p302) target = $region48
        $region47: #{tpu_custom_call.1} parent=39 // pred_region
          %s305 = sand.u32 %s58, 1
          %s306 = scalar_lea.sflag [#allocation3], %s305
          %s307 = sand.u32 %s58, 1
          %s308 = smul.addr %s307, 8
          %s309 = scalar_lea.vmem [#allocation2], %s308
          %311 = vsyncadd %s306, 0
          %s312 = smul.addr %s22, 8
          %s313 = scalar_lea.hbm %s1, %s312
          %s315 = sshll.u32 %s313, 4
          %s316 = int_to_ptr.hbm [resolvable:$true] %s315
          %s317 = sshll.u32 %s309, 4
          %s318 = int_to_ptr.vmem [resolvable:$true] %s317
          %320 = dma.hbm_to_vmem [thread:$0]  %s316, 128, %s318, %s306
        $region48: #{tpu_custom_call.1} parent=39 // pred_fallthru
          _
      $region40: #{tpu_custom_call.1} parent=5 // pred_fallthru
        _
      %p321 = scmp.le.s32.totalorder 1, %s22
      %p322 = scmp.lt.s32.totalorder %s22, 3
      %p323 = pnand %p321, %p322
      %p324 = pneg %p323
      // Predicated region
      $region49: #{tpu_custom_call.1} parent=5 // pred_check
        _
      $region50: #{tpu_custom_call.1} parent=5 // pred_check_branch
        %326 = sbr.rel (%p323) target = $region52
      $region51: #{tpu_custom_call.1} parent=5 // pred_region
        %s327 = ssub.s32 %s22, 1
        %s328 = sand.u32 %s61, 1
        %s329 = scalar_lea.sflag [#allocation3], %s328
        %s330 = sand.u32 %s61, 1
        %s331 = smul.addr %s330, 8
        %s332 = scalar_lea.vmem [#allocation2], %s331
        // Predicated region
        $region53: #{tpu_custom_call.1} parent=51 // pred_check
          %p333 = pneg %p74
        $region54: #{tpu_custom_call.1} parent=51 // pred_check_branch
          %335 = sbr.rel (%p333) target = $region56
        $region55: #{tpu_custom_call.1} parent=51 // pred_region
          %337 = dma.done %s329, 128
        $region56: #{tpu_custom_call.1} parent=51 // pred_fallthru
          _
        // Predicated region
        $region57: #{tpu_custom_call.1} parent=51 // pred_check
          %p338 = pneg %p95
        $region58: #{tpu_custom_call.1} parent=51 // pred_check_branch
          %340 = sbr.rel (%p338) target = $region60
        $region59: #{tpu_custom_call.1} parent=51 // pred_region
          %342 = dma.done [#allocation6], 160
        $region60: #{tpu_custom_call.1} parent=51 // pred_fallthru
          _
        // Predicated region
        $region61: #{tpu_custom_call.1} parent=51 // pred_check
          %p343 = pneg %p158
        $region62: #{tpu_custom_call.1} parent=51 // pred_check_branch
          %345 = sbr.rel (%p343) target = $region64
        $region63: #{tpu_custom_call.1} parent=51 // pred_region
          %347 = dma.done [#allocation6], 64
        $region64: #{tpu_custom_call.1} parent=51 // pred_fallthru
          _
        // Predicated region
        $region65: #{tpu_custom_call.1} parent=51 // pred_check
          %p348 = pneg %p200
        $region66: #{tpu_custom_call.1} parent=51 // pred_check_branch
          %350 = sbr.rel (%p348) target = $region68
        $region67: #{tpu_custom_call.1} parent=51 // pred_region
          %352 = dma.done [#allocation9], 512
        $region68: #{tpu_custom_call.1} parent=51 // pred_fallthru
          _
        %p353 = scmp.lt.s32.totalorder %s27, 1
        %s354 = scalar_select %p353, %s27, 1
        %s355 = scalar_lea.vmem %s0, %s354
        %p356 = pneg %p48
        %p357 = pneg %p45
        %s358 = sand.u32 %s61, 1
        %s359 = scalar_lea.sflag [#allocation3], %s358
        %s360 = sand.u32 %s61, 1
        %s361 = smul.addr %s360, 8
        %s362 = scalar_lea.vmem [#allocation2], %s361
        %p363 = pneg %p74
        %p364 = pneg %p71
        %p365 = pneg %p95
        %p366 = pneg %p92
        %p367 = pneg %p116
        %p368 = pneg %p113
        %p369 = pneg %p137
        %p370 = pneg %p134
        %p371 = pneg %p158
        %p372 = pneg %p155
        %p373 = pneg %p179
        %p374 = pneg %p176
        %p375 = pneg %p200
        %p376 = pneg %p197
        %p377 = pneg %p226
        %p378 = pneg %p223
        %s379 = sand.u32 %s213, 1
        %s380 = scalar_lea.sflag [#allocation4], %s379
        %s381 = sand.u32 %s213, 1
        %s382 = smul.addr %s381, 8
        %s383 = scalar_lea.vmem [#allocation10], %s382
        %p384 = scmp.lt.s32.totalorder %s27, 1
        %s385 = scalar_select %p384, %s27, 1
        %s386 = scalar_lea.vmem %s0, %s385
        %v387 = vld [vmem:[%s332] sm:$0xff]
        %v388 = vld [vmem:[%s386] sm:$0x1]
        %v389 = vlaneseq
        %v390 = vshrl.u32 %v389, 7
        %v391 = vlaneseq
        %v392 = vand.u32 %v391, 127
        %vm393 = vcmp.le.s32.totalorder %v392, %v390
        %vm394 = vcmp.gt.f32.partialorder %v388, 0.5
        %v395 = vsel %vm394, 1, 0
        %v396 = vperm.slane %v395, 0
        %vm397 = vcmp.eq.s32.totalorder %v396, 1
        %vm398 = vmand %vm393, %vm397
        %v399 = vsel %vm398, 0.0, -1e+09
        %v400 = vld [vmem:[#allocation5] sm:$0x3]
        %vm401 = vcmask 261120
        %v402 = vsel %vm401, %v387, 0.0
        %403 = vadd.xlane.f32.xlu0 %v402
        %v404 = vpop.xlane.xlu0 %403
        %v405 = vrcp.pop 32.0
        %v406 = vmul.f32 32.0, %v405
        %v407 = vsub.f32 1.0, %v406
        %v408 = vmul.f32 %v405, %v407
        %v409 = vadd.f32 %v405, %v408
        %vm410 = vweird.f32 %v405
        %v411 = vsel %vm410, %v405, %v409
        %v412 = vmul.f32 %v404, %v411
        %v413 = vmul.f32 %v387, %v387
        %v414 = vsel %vm401, %v413, 0.0
        %415 = vadd.xlane.f32.xlu0 %v414
        %v416 = vpop.xlane.xlu0 %415
        %v417 = vmul.f32 %v416, %v411
        %v418 = vmul.f32 %v412, %v412
        %v419 = vsub.f32 %v417, %v418
        %v420 = vsub.f32 %v387, %v412
        %v421 = vadd.f32 %v419, 1e-06
        %v422 = vrsqrt.pop %v421
        %v423 = vmul.f32 %v422, %v421
        %v424 = vmul.f32 %v423, %v422
        %v425 = vmul.f32 0.5, %v424
        %v426 = vsub.f32 1.5, %v425
        %v427 = vmul.f32 %v422, %v426
        %vm428 = vweird.f32 %v421
        %vm429 = vweird.f32 %v422
        %vm430 = vmor %vm428, %vm429
        %v431 = vsel %vm430, %v422, %v427
        %v432 = vmul.f32 %v420, %v431
        %v433 = vperm.slane %v400, 0
        %v434 = vmul.f32 %v432, %v433
        %v435 = vperm.slane %v400, 1
        %v436 = vadd.f32 %v434, %v435
        %v437 = vld [vmem:[%s3] sm:$0xff]
        %v438 = vld [vmem:[%s3 + $0x8] sm:$0xff]
        %v439 = vld [vmem:[%s3 + $0x10] sm:$0xff]
        %v440 = vld [vmem:[%s3 + $0x18] sm:$0xff]
        %v441 = vld [vmem:[%s3 + $0x20] sm:$0xff]
        %v442 = vld [vmem:[%s3 + $0x28] sm:$0xff]
        %v443 = vld [vmem:[%s3 + $0x30] sm:$0xff]
        %v444 = vld [vmem:[%s3 + $0x38] sm:$0xff]
        %v446 = vsel %vm401, %v436, 0
        %448 = vmatpush.msra.mxu0 0.0
        %449 = vmatpush.msra.mxu0 0.0
        %450 = vmatpush.msra.mxu0 0.0
        %451 = vmatpush.msra.mxu0 0.0
        %452 = vmatpush.msra.mxu0 0.0
        %453 = vmatpush.msra.mxu0 0.0
        %454 = vmatpush.msra.mxu0 0.0
        %455 = vmatpush.msra.mxu0 0.0
        %456 = vmatpush.msra.mxu0 0.0
        %457 = vmatpush.msra.mxu0 0.0
        %458 = vmatpush.msra.mxu0 0.0
        %459 = vmatpush.msra.mxu0 0.0
        %460 = vmatpush.msra.mxu0 %v443
        %461 = vmatpush.msra.mxu0 %v441
        %462 = vmatpush.msra.mxu0 %v439
        %463 = vmatpush.msra.mxu0 %v437
        %464 = vmatmul.f32.gmra.mxu0 %v446
        %v465 = vpop.f32.mrf.mxu0
        %v466 = vadd.f32 0.0, %v465
        %467 = vdwg.mxu0
        %468 = vmatpush.msra.mxu0 0.0
        %469 = vmatpush.msra.mxu0 0.0
        %470 = vmatpush.msra.mxu0 0.0
        %471 = vmatpush.msra.mxu0 0.0
        %472 = vmatpush.msra.mxu0 0.0
        %473 = vmatpush.msra.mxu0 0.0
        %474 = vmatpush.msra.mxu0 0.0
        %475 = vmatpush.msra.mxu0 0.0
        %476 = vmatpush.msra.mxu0 0.0
        %477 = vmatpush.msra.mxu0 0.0
        %478 = vmatpush.msra.mxu0 0.0
        %479 = vmatpush.msra.mxu0 0.0
        %480 = vmatpush.msra.mxu0 %v444
        %481 = vmatpush.msra.mxu0 %v442
        %482 = vmatpush.msra.mxu0 %v440
        %483 = vmatpush.msra.mxu0 %v438
        %484 = vmatmul.f32.gmra.mxu0 %v446
        %v485 = vpop.f32.mrf.mxu0
        %v486 = vadd.f32 0.0, %v485
        %487 = vdwg.mxu0
        %489 = vrot.lane.b32.xlu0 %v486, 120
        %v490 = vpop.permute.xlu0 %489
        %491 = vrot.lane.b32.xlu0 %v486, 112
        %v492 = vpop.permute.xlu0 %491
        %493 = vrot.lane.b32.xlu0 %v486, 104
        %v494 = vpop.permute.xlu0 %493
        %496 = vrot.lane.b32.xlu0 %v466, 96
        %v497 = vpop.permute.xlu0 %496
        %499 = vrot.lane.b32.xlu0 %v466, 64
        %v500 = vpop.permute.xlu0 %499
        %502 = vrot.lane.b32.xlu0 %v466, 32
        %v503 = vpop.permute.xlu0 %502
        %505 = vrot.lane.b32.xlu0 %v486, 96
        %v506 = vpop.permute.xlu0 %505
        %vm507 = vcmask 64512
        %v508 = vsel %vm507, %v486, 0
        %v510 = vsel %vm507, %v506, 0
        %512 = vmatpush.xpose.msra.mxu0 0.0
        %513 = vmatpush.xpose.msra.mxu0 0.0
        %514 = vmatpush.xpose.msra.mxu0 0.0
        %515 = vmatpush.xpose.msra.mxu0 0.0
        %516 = vmatpush.xpose.msra.mxu0 0.0
        %517 = vmatpush.xpose.msra.mxu0 0.0
        %518 = vmatpush.xpose.msra.mxu0 0.0
        %519 = vmatpush.xpose.msra.mxu0 0.0
        %520 = vmatpush.xpose.msra.mxu0 0.0
        %521 = vmatpush.xpose.msra.mxu0 0.0
        %522 = vmatpush.xpose.msra.mxu0 0.0
        %523 = vmatpush.xpose.msra.mxu0 0.0
        %524 = vmatpush.xpose.msra.mxu0 0.0
        %525 = vmatpush.xpose.msra.mxu0 0.0
        %526 = vmatpush.xpose.msra.mxu0 0.0
        %527 = vmatpush.xpose.msra.mxu0 %v510
        %528 = vmatmul.f32.gmra.mxu0 %v508
        %v529 = vpop.f32.mrf.mxu0
        %v530 = vadd.f32 0.0, %v529
        %531 = vdwg.mxu0
        %532 = vrot.lane.b32.xlu0 %v490, 96
        %v533 = vpop.permute.xlu0 %532
        %v534 = vsel %vm507, %v490, 0
        %v536 = vsel %vm507, %v533, 0
        %538 = vmatpush.xpose.msra.mxu0 0.0
        %539 = vmatpush.xpose.msra.mxu0 0.0
        %540 = vmatpush.xpose.msra.mxu0 0.0
        %541 = vmatpush.xpose.msra.mxu0 0.0
        %542 = vmatpush.xpose.msra.mxu0 0.0
        %543 = vmatpush.xpose.msra.mxu0 0.0
        %544 = vmatpush.xpose.msra.mxu0 0.0
        %545 = vmatpush.xpose.msra.mxu0 0.0
        %546 = vmatpush.xpose.msra.mxu0 0.0
        %547 = vmatpush.xpose.msra.mxu0 0.0
        %548 = vmatpush.xpose.msra.mxu0 0.0
        %549 = vmatpush.xpose.msra.mxu0 0.0
        %550 = vmatpush.xpose.msra.mxu0 0.0
        %551 = vmatpush.xpose.msra.mxu0 0.0
        %552 = vmatpush.xpose.msra.mxu0 0.0
        %553 = vmatpush.xpose.msra.mxu0 %v536
        %554 = vmatmul.f32.gmra.mxu0 %v534
        %v555 = vpop.f32.mrf.mxu0
        %v556 = vadd.f32 0.0, %v555
        %557 = vdwg.mxu0
        %558 = vrot.lane.b32.xlu0 %v492, 96
        %v559 = vpop.permute.xlu0 %558
        %v560 = vsel %vm507, %v492, 0
        %v562 = vsel %vm507, %v559, 0
        %564 = vmatpush.xpose.msra.mxu0 0.0
        %565 = vmatpush.xpose.msra.mxu0 0.0
        %566 = vmatpush.xpose.msra.mxu0 0.0
        %567 = vmatpush.xpose.msra.mxu0 0.0
        %568 = vmatpush.xpose.msra.mxu0 0.0
        %569 = vmatpush.xpose.msra.mxu0 0.0
        %570 = vmatpush.xpose.msra.mxu0 0.0
        %571 = vmatpush.xpose.msra.mxu0 0.0
        %572 = vmatpush.xpose.msra.mxu0 0.0
        %573 = vmatpush.xpose.msra.mxu0 0.0
        %574 = vmatpush.xpose.msra.mxu0 0.0
        %575 = vmatpush.xpose.msra.mxu0 0.0
        %576 = vmatpush.xpose.msra.mxu0 0.0
        %577 = vmatpush.xpose.msra.mxu0 0.0
        %578 = vmatpush.xpose.msra.mxu0 0.0
        %579 = vmatpush.xpose.msra.mxu0 %v562
        %580 = vmatmul.f32.gmra.mxu0 %v560
        %v581 = vpop.f32.mrf.mxu0
        %v582 = vadd.f32 0.0, %v581
        %583 = vdwg.mxu0
        %584 = vrot.lane.b32.xlu0 %v494, 96
        %v585 = vpop.permute.xlu0 %584
        %v586 = vsel %vm507, %v494, 0
        %v588 = vsel %vm507, %v585, 0
        %590 = vmatpush.xpose.msra.mxu0 0.0
        %591 = vmatpush.xpose.msra.mxu0 0.0
        %592 = vmatpush.xpose.msra.mxu0 0.0
        %593 = vmatpush.xpose.msra.mxu0 0.0
        %594 = vmatpush.xpose.msra.mxu0 0.0
        %595 = vmatpush.xpose.msra.mxu0 0.0
        %596 = vmatpush.xpose.msra.mxu0 0.0
        %597 = vmatpush.xpose.msra.mxu0 0.0
        %598 = vmatpush.xpose.msra.mxu0 0.0
        %599 = vmatpush.xpose.msra.mxu0 0.0
        %600 = vmatpush.xpose.msra.mxu0 0.0
        %601 = vmatpush.xpose.msra.mxu0 0.0
        %602 = vmatpush.xpose.msra.mxu0 0.0
        %603 = vmatpush.xpose.msra.mxu0 0.0
        %604 = vmatpush.xpose.msra.mxu0 0.0
        %605 = vmatpush.xpose.msra.mxu0 %v588
        %606 = vmatmul.f32.gmra.mxu0 %v586
        %v607 = vpop.f32.mrf.mxu0
        %v608 = vadd.f32 0.0, %v607
        %609 = vdwg.mxu0
        %v610 = vmul.f32 %v530, 0.35355338
        %v611 = vmul.f32 %v556, 0.35355338
        %v612 = vmul.f32 %v582, 0.35355338
        %v613 = vmul.f32 %v608, 0.35355338
        %v614 = vadd.f32 %v610, %v399
        %v615 = vadd.f32 %v611, %v399
        %v616 = vadd.f32 %v612, %v399
        %v617 = vadd.f32 %v613, %v399
        %v618 = vsel %vm507, %v614, -inf
        %619 = vmax.xlane.f32.xlu0 %v618
        %v620 = vpop.xlane.xlu0 %619
        %v621 = vsel %vm507, %v615, -inf
        %622 = vmax.xlane.f32.xlu0 %v621
        %v623 = vpop.xlane.xlu0 %622
        %v624 = vsel %vm507, %v616, -inf
        %625 = vmax.xlane.f32.xlu0 %v624
        %v626 = vpop.xlane.xlu0 %625
        %v627 = vsel %vm507, %v617, -inf
        %628 = vmax.xlane.f32.xlu0 %v627
        %v629 = vpop.xlane.xlu0 %628
        %v630 = vsub.f32 %v614, %v620
        %v631 = vsub.f32 %v615, %v623
        %v632 = vsub.f32 %v616, %v626
        %v633 = vsub.f32 %v617, %v629
        %v634 = vmul.f32 %v630, 1.442695
        %v635 = vpow.pop %v634
        %v636 = vmul.f32 %v631, 1.442695
        %v637 = vpow.pop %v636
        %v638 = vmul.f32 %v632, 1.442695
        %v639 = vpow.pop %v638
        %v640 = vmul.f32 %v633, 1.442695
        %v641 = vpow.pop %v640
        %v642 = vsel %vm507, %v635, 0.0
        %643 = vadd.xlane.f32.xlu0 %v642
        %v644 = vpop.xlane.xlu0 %643
        %v645 = vsel %vm507, %v637, 0.0
        %646 = vadd.xlane.f32.xlu0 %v645
        %v647 = vpop.xlane.xlu0 %646
        %v648 = vsel %vm507, %v639, 0.0
        %649 = vadd.xlane.f32.xlu0 %v648
        %v650 = vpop.xlane.xlu0 %649
        %v651 = vsel %vm507, %v641, 0.0
        %652 = vadd.xlane.f32.xlu0 %v651
        %v653 = vpop.xlane.xlu0 %652
        %v654 = vrcp.pop %v644
        %v655 = vrcp.pop %v647
        %v656 = vrcp.pop %v650
        %v657 = vrcp.pop %v653
        %v658 = vmul.f32 %v635, %v654
        %v659 = vmul.f32 %v637, %v655
        %v660 = vmul.f32 %v639, %v656
        %v661 = vmul.f32 %v641, %v657
        %v663 = vsel %vm507, %v658, 0
        %665 = vmatpush.msra.mxu0 0.0
        %666 = vmatpush.msra.mxu0 0.0
        %667 = vmatpush.msra.mxu0 0.0
        %668 = vmatpush.msra.mxu0 0.0
        %669 = vmatpush.msra.mxu0 0.0
        %670 = vmatpush.msra.mxu0 0.0
        %671 = vmatpush.msra.mxu0 0.0
        %672 = vmatpush.msra.mxu0 0.0
        %673 = vmatpush.msra.mxu0 0.0
        %674 = vmatpush.msra.mxu0 0.0
        %675 = vmatpush.msra.mxu0 0.0
        %676 = vmatpush.msra.mxu0 0.0
        %677 = vmatpush.msra.mxu0 0.0
        %678 = vmatpush.msra.mxu0 0.0
        %679 = vmatpush.msra.mxu0 0.0
        %680 = vmatpush.msra.mxu0 %v466
        %681 = vmatmul.f32.gmra.mxu0 %v663
        %v682 = vpop.f32.mrf.mxu0
        %v683 = vadd.f32 0.0, %v682
        %684 = vdwg.mxu0
        %v686 = vsel %vm507, %v659, 0
        %688 = vmatpush.msra.mxu0 0.0
        %689 = vmatpush.msra.mxu0 0.0
        %690 = vmatpush.msra.mxu0 0.0
        %691 = vmatpush.msra.mxu0 0.0
        %692 = vmatpush.msra.mxu0 0.0
        %693 = vmatpush.msra.mxu0 0.0
        %694 = vmatpush.msra.mxu0 0.0
        %695 = vmatpush.msra.mxu0 0.0
        %696 = vmatpush.msra.mxu0 0.0
        %697 = vmatpush.msra.mxu0 0.0
        %698 = vmatpush.msra.mxu0 0.0
        %699 = vmatpush.msra.mxu0 0.0
        %700 = vmatpush.msra.mxu0 0.0
        %701 = vmatpush.msra.mxu0 0.0
        %702 = vmatpush.msra.mxu0 0.0
        %703 = vmatpush.msra.mxu0 %v497
        %704 = vmatmul.f32.gmra.mxu0 %v686
        %v705 = vpop.f32.mrf.mxu0
        %v706 = vadd.f32 0.0, %v705
        %707 = vdwg.mxu0
        %v709 = vsel %vm507, %v660, 0
        %711 = vmatpush.msra.mxu0 0.0
        %712 = vmatpush.msra.mxu0 0.0
        %713 = vmatpush.msra.mxu0 0.0
        %714 = vmatpush.msra.mxu0 0.0
        %715 = vmatpush.msra.mxu0 0.0
        %716 = vmatpush.msra.mxu0 0.0
        %717 = vmatpush.msra.mxu0 0.0
        %718 = vmatpush.msra.mxu0 0.0
        %719 = vmatpush.msra.mxu0 0.0
        %720 = vmatpush.msra.mxu0 0.0
        %721 = vmatpush.msra.mxu0 0.0
        %722 = vmatpush.msra.mxu0 0.0
        %723 = vmatpush.msra.mxu0 0.0
        %724 = vmatpush.msra.mxu0 0.0
        %725 = vmatpush.msra.mxu0 0.0
        %726 = vmatpush.msra.mxu0 %v500
        %727 = vmatmul.f32.gmra.mxu0 %v709
        %v728 = vpop.f32.mrf.mxu0
        %v729 = vadd.f32 0.0, %v728
        %730 = vdwg.mxu0
        %v732 = vsel %vm507, %v661, 0
        %734 = vmatpush.msra.mxu0 0.0
        %735 = vmatpush.msra.mxu0 0.0
        %736 = vmatpush.msra.mxu0 0.0
        %737 = vmatpush.msra.mxu0 0.0
        %738 = vmatpush.msra.mxu0 0.0
        %739 = vmatpush.msra.mxu0 0.0
        %740 = vmatpush.msra.mxu0 0.0
        %741 = vmatpush.msra.mxu0 0.0
        %742 = vmatpush.msra.mxu0 0.0
        %743 = vmatpush.msra.mxu0 0.0
        %744 = vmatpush.msra.mxu0 0.0
        %745 = vmatpush.msra.mxu0 0.0
        %746 = vmatpush.msra.mxu0 0.0
        %747 = vmatpush.msra.mxu0 0.0
        %748 = vmatpush.msra.mxu0 0.0
        %749 = vmatpush.msra.mxu0 %v503
        %750 = vmatmul.f32.gmra.mxu0 %v732
        %v751 = vpop.f32.mrf.mxu0
        %v752 = vadd.f32 0.0, %v751
        %753 = vdwg.mxu0
        %v754 = vadd.f32 %v683, %v706
        %v755 = vadd.f32 %v754, %v729
        %v756 = vadd.f32 %v755, %v752
        %s757 = scalar_lea.vmem [#allocation5], 2
        %v758 = vld [vmem:[%s757] sm:$0x3]
        %v759 = vadd.f32 %v436, %v756
        %v760 = vsel %vm401, %v759, 0.0
        %761 = vadd.xlane.f32.xlu0 %v760
        %v762 = vpop.xlane.xlu0 %761
        %v763 = vmul.f32 %v762, %v411
        %v764 = vmul.f32 %v759, %v759
        %v765 = vsel %vm401, %v764, 0.0
        %766 = vadd.xlane.f32.xlu0 %v765
        %v767 = vpop.xlane.xlu0 %766
        %v768 = vmul.f32 %v767, %v411
        %v769 = vmul.f32 %v763, %v763
        %v770 = vsub.f32 %v768, %v769
        %v771 = vsub.f32 %v759, %v763
        %v772 = vadd.f32 %v770, 1e-06
        %v773 = vrsqrt.pop %v772
        %v774 = vmul.f32 %v773, %v772
        %v775 = vmul.f32 %v774, %v773
        %v776 = vmul.f32 0.5, %v775
        %v777 = vsub.f32 1.5, %v776
        %v778 = vmul.f32 %v773, %v777
        %vm779 = vweird.f32 %v772
        %vm780 = vweird.f32 %v773
        %vm781 = vmor %vm779, %vm780
        %v782 = vsel %vm781, %v773, %v778
        %v783 = vmul.f32 %v771, %v782
        %v784 = vperm.slane %v758, 0
        %v785 = vmul.f32 %v783, %v784
        %v786 = vperm.slane %v758, 1
        %v787 = vadd.f32 %v785, %v786
        %v788 = vld [vmem:[#allocation7] sm:$0x3]
        %v789 = vld [vmem:[%s4] sm:$0xff]
        %v790 = vld [vmem:[%s4 + $0x8] sm:$0xff]
        %v791 = vld [vmem:[%s4 + $0x10] sm:$0xff]
        %v792 = vld [vmem:[%s4 + $0x18] sm:$0xff]
        %v793 = vperm.slane %v788, 0
        %v795 = vsel %vm401, %v787, 0
        %797 = vmatpush.msra.mxu0 0.0
        %798 = vmatpush.msra.mxu0 0.0
        %799 = vmatpush.msra.mxu0 0.0
        %800 = vmatpush.msra.mxu0 0.0
        %801 = vmatpush.msra.mxu0 0.0
        %802 = vmatpush.msra.mxu0 0.0
        %803 = vmatpush.msra.mxu0 0.0
        %804 = vmatpush.msra.mxu0 0.0
        %805 = vmatpush.msra.mxu0 0.0
        %806 = vmatpush.msra.mxu0 0.0
        %807 = vmatpush.msra.mxu0 0.0
        %808 = vmatpush.msra.mxu0 0.0
        %809 = vmatpush.msra.mxu0 %v792
        %810 = vmatpush.msra.mxu0 %v791
        %811 = vmatpush.msra.mxu0 %v790
        %812 = vmatpush.msra.mxu0 %v789
        %813 = vmatmul.f32.gmra.mxu0 %v795
        %v814 = vpop.f32.mrf.mxu0
        %v815 = vadd.f32 %v793, %v814
        %816 = vdwg.mxu0
        %v817 = vmax.f32 %v815, 0.0
        %v818 = vld [vmem:[%s6] sm:$0xff]
        %v819 = vld [vmem:[%s6 + $0x8] sm:$0xff]
        %v820 = vld [vmem:[%s6 + $0x10] sm:$0xff]
        %v821 = vld [vmem:[%s6 + $0x18] sm:$0xff]
        %v822 = vld [vmem:[%s6 + $0x20] sm:$0xff]
        %v823 = vld [vmem:[%s6 + $0x28] sm:$0xff]
        %v824 = vld [vmem:[%s6 + $0x30] sm:$0xff]
        %v825 = vld [vmem:[%s6 + $0x38] sm:$0xff]
        %v826 = vperm.slane %v788, 1
        %vm827 = vcmask 523264
        %v829 = vsel %vm827, %v817, 0
        %831 = vmatpush.msra.mxu0 0.0
        %832 = vmatpush.msra.mxu0 0.0
        %833 = vmatpush.msra.mxu0 0.0
        %834 = vmatpush.msra.mxu0 0.0
        %835 = vmatpush.msra.mxu0 0.0
        %836 = vmatpush.msra.mxu0 0.0
        %837 = vmatpush.msra.mxu0 0.0
        %838 = vmatpush.msra.mxu0 0.0
        %839 = vmatpush.msra.mxu0 %v825
        %840 = vmatpush.msra.mxu0 %v824
        %841 = vmatpush.msra.mxu0 %v823
        %842 = vmatpush.msra.mxu0 %v822
        %843 = vmatpush.msra.mxu0 %v821
        %844 = vmatpush.msra.mxu0 %v820
        %845 = vmatpush.msra.mxu0 %v819
        %846 = vmatpush.msra.mxu0 %v818
        %847 = vmatmul.f32.gmra.mxu0 %v829
        %v848 = vpop.f32.mrf.mxu0
        %v849 = vadd.f32 %v826, %v848
        %850 = vdwg.mxu0
        %s851 = scalar_lea.vmem [#allocation5], 6
        %v852 = vld [vmem:[%s851] sm:$0x3]
        %v853 = vadd.f32 %v787, %v849
        %v854 = vsel %vm401, %v853, 0.0
        %855 = vadd.xlane.f32.xlu0 %v854
        %v856 = vpop.xlane.xlu0 %855
        %v857 = vmul.f32 %v856, %v411
        %v858 = vmul.f32 %v853, %v853
        %v859 = vsel %vm401, %v858, 0.0
        %860 = vadd.xlane.f32.xlu0 %v859
        %v861 = vpop.xlane.xlu0 %860
        %v862 = vmul.f32 %v861, %v411
        %v863 = vmul.f32 %v857, %v857
        %v864 = vsub.f32 %v862, %v863
        %v865 = vsub.f32 %v853, %v857
        %v866 = vadd.f32 %v864, 1e-06
        %v867 = vrsqrt.pop %v866
        %v868 = vmul.f32 %v867, %v866
        %v869 = vmul.f32 %v868, %v867
        %v870 = vmul.f32 0.5, %v869
        %v871 = vsub.f32 1.5, %v870
        %v872 = vmul.f32 %v867, %v871
        %vm873 = vweird.f32 %v866
        %vm874 = vweird.f32 %v867
        %vm875 = vmor %vm873, %vm874
        %v876 = vsel %vm875, %v867, %v872
        %v877 = vmul.f32 %v865, %v876
        %v878 = vperm.slane %v852, 0
        %v879 = vmul.f32 %v877, %v878
        %v880 = vperm.slane %v852, 1
        %v881 = vadd.f32 %v879, %v880
        %s882 = scalar_lea.vmem %s3, 64
        %v883 = vld [vmem:[%s882] sm:$0xff]
        %v884 = vld [vmem:[%s882 + $0x8] sm:$0xff]
        %v885 = vld [vmem:[%s882 + $0x10] sm:$0xff]
        %v886 = vld [vmem:[%s882 + $0x18] sm:$0xff]
        %v887 = vld [vmem:[%s882 + $0x20] sm:$0xff]
        %v888 = vld [vmem:[%s882 + $0x28] sm:$0xff]
        %v889 = vld [vmem:[%s882 + $0x30] sm:$0xff]
        %v890 = vld [vmem:[%s882 + $0x38] sm:$0xff]
        %v892 = vsel %vm401, %v881, 0
        %894 = vmatpush.msra.mxu0 0.0
        %895 = vmatpush.msra.mxu0 0.0
        %896 = vmatpush.msra.mxu0 0.0
        %897 = vmatpush.msra.mxu0 0.0
        %898 = vmatpush.msra.mxu0 0.0
        %899 = vmatpush.msra.mxu0 0.0
        %900 = vmatpush.msra.mxu0 0.0
        %901 = vmatpush.msra.mxu0 0.0
        %902 = vmatpush.msra.mxu0 0.0
        %903 = vmatpush.msra.mxu0 0.0
        %904 = vmatpush.msra.mxu0 0.0
        %905 = vmatpush.msra.mxu0 0.0
        %906 = vmatpush.msra.mxu0 %v889
        %907 = vmatpush.msra.mxu0 %v887
        %908 = vmatpush.msra.mxu0 %v885
        %909 = vmatpush.msra.mxu0 %v883
        %910 = vmatmul.f32.gmra.mxu0 %v892
        %v911 = vpop.f32.mrf.mxu0
        %v912 = vadd.f32 0.0, %v911
        %913 = vdwg.mxu0
        %914 = vmatpush.msra.mxu0 0.0
        %915 = vmatpush.msra.mxu0 0.0
        %916 = vmatpush.msra.mxu0 0.0
        %917 = vmatpush.msra.mxu0 0.0
        %918 = vmatpush.msra.mxu0 0.0
        %919 = vmatpush.msra.mxu0 0.0
        %920 = vmatpush.msra.mxu0 0.0
        %921 = vmatpush.msra.mxu0 0.0
        %922 = vmatpush.msra.mxu0 0.0
        %923 = vmatpush.msra.mxu0 0.0
        %924 = vmatpush.msra.mxu0 0.0
        %925 = vmatpush.msra.mxu0 0.0
        %926 = vmatpush.msra.mxu0 %v890
        %927 = vmatpush.msra.mxu0 %v888
        %928 = vmatpush.msra.mxu0 %v886
        %929 = vmatpush.msra.mxu0 %v884
        %930 = vmatmul.f32.gmra.mxu0 %v892
        %v931 = vpop.f32.mrf.mxu0
        %v932 = vadd.f32 0.0, %v931
        %933 = vdwg.mxu0
        %935 = vrot.lane.b32.xlu0 %v932, 120
        %v936 = vpop.permute.xlu0 %935
        %937 = vrot.lane.b32.xlu0 %v932, 112
        %v938 = vpop.permute.xlu0 %937
        %939 = vrot.lane.b32.xlu0 %v932, 104
        %v940 = vpop.permute.xlu0 %939
        %942 = vrot.lane.b32.xlu0 %v912, 96
        %v943 = vpop.permute.xlu0 %942
        %945 = vrot.lane.b32.xlu0 %v912, 64
        %v946 = vpop.permute.xlu0 %945
        %948 = vrot.lane.b32.xlu0 %v912, 32
        %v949 = vpop.permute.xlu0 %948
        %951 = vrot.lane.b32.xlu0 %v932, 96
        %v952 = vpop.permute.xlu0 %951
        %v953 = vsel %vm507, %v932, 0
        %v955 = vsel %vm507, %v952, 0
        %957 = vmatpush.xpose.msra.mxu0 0.0
        %958 = vmatpush.xpose.msra.mxu0 0.0
        %959 = vmatpush.xpose.msra.mxu0 0.0
        %960 = vmatpush.xpose.msra.mxu0 0.0
        %961 = vmatpush.xpose.msra.mxu0 0.0
        %962 = vmatpush.xpose.msra.mxu0 0.0
        %963 = vmatpush.xpose.msra.mxu0 0.0
        %964 = vmatpush.xpose.msra.mxu0 0.0
        %965 = vmatpush.xpose.msra.mxu0 0.0
        %966 = vmatpush.xpose.msra.mxu0 0.0
        %967 = vmatpush.xpose.msra.mxu0 0.0
        %968 = vmatpush.xpose.msra.mxu0 0.0
        %969 = vmatpush.xpose.msra.mxu0 0.0
        %970 = vmatpush.xpose.msra.mxu0 0.0
        %971 = vmatpush.xpose.msra.mxu0 0.0
        %972 = vmatpush.xpose.msra.mxu0 %v955
        %973 = vmatmul.f32.gmra.mxu0 %v953
        %v974 = vpop.f32.mrf.mxu0
        %v975 = vadd.f32 0.0, %v974
        %976 = vdwg.mxu0
        %977 = vrot.lane.b32.xlu0 %v936, 96
        %v978 = vpop.permute.xlu0 %977
        %v979 = vsel %vm507, %v936, 0
        %v981 = vsel %vm507, %v978, 0
        %983 = vmatpush.xpose.msra.mxu0 0.0
        %984 = vmatpush.xpose.msra.mxu0 0.0
        %985 = vmatpush.xpose.msra.mxu0 0.0
        %986 = vmatpush.xpose.msra.mxu0 0.0
        %987 = vmatpush.xpose.msra.mxu0 0.0
        %988 = vmatpush.xpose.msra.mxu0 0.0
        %989 = vmatpush.xpose.msra.mxu0 0.0
        %990 = vmatpush.xpose.msra.mxu0 0.0
        %991 = vmatpush.xpose.msra.mxu0 0.0
        %992 = vmatpush.xpose.msra.mxu0 0.0
        %993 = vmatpush.xpose.msra.mxu0 0.0
        %994 = vmatpush.xpose.msra.mxu0 0.0
        %995 = vmatpush.xpose.msra.mxu0 0.0
        %996 = vmatpush.xpose.msra.mxu0 0.0
        %997 = vmatpush.xpose.msra.mxu0 0.0
        %998 = vmatpush.xpose.msra.mxu0 %v981
        %999 = vmatmul.f32.gmra.mxu0 %v979
        %v1000 = vpop.f32.mrf.mxu0
        %v1001 = vadd.f32 0.0, %v1000
        %1002 = vdwg.mxu0
        %1003 = vrot.lane.b32.xlu0 %v938, 96
        %v1004 = vpop.permute.xlu0 %1003
        %v1005 = vsel %vm507, %v938, 0
        %v1007 = vsel %vm507, %v1004, 0
        %1009 = vmatpush.xpose.msra.mxu0 0.0
        %1010 = vmatpush.xpose.msra.mxu0 0.0
        %1011 = vmatpush.xpose.msra.mxu0 0.0
        %1012 = vmatpush.xpose.msra.mxu0 0.0
        %1013 = vmatpush.xpose.msra.mxu0 0.0
        %1014 = vmatpush.xpose.msra.mxu0 0.0
        %1015 = vmatpush.xpose.msra.mxu0 0.0
        %1016 = vmatpush.xpose.msra.mxu0 0.0
        %1017 = vmatpush.xpose.msra.mxu0 0.0
        %1018 = vmatpush.xpose.msra.mxu0 0.0
        %1019 = vmatpush.xpose.msra.mxu0 0.0
        %1020 = vmatpush.xpose.msra.mxu0 0.0
        %1021 = vmatpush.xpose.msra.mxu0 0.0
        %1022 = vmatpush.xpose.msra.mxu0 0.0
        %1023 = vmatpush.xpose.msra.mxu0 0.0
        %1024 = vmatpush.xpose.msra.mxu0 %v1007
        %1025 = vmatmul.f32.gmra.mxu0 %v1005
        %v1026 = vpop.f32.mrf.mxu0
        %v1027 = vadd.f32 0.0, %v1026
        %1028 = vdwg.mxu0
        %1029 = vrot.lane.b32.xlu0 %v940, 96
        %v1030 = vpop.permute.xlu0 %1029
        %v1031 = vsel %vm507, %v940, 0
        %v1033 = vsel %vm507, %v1030, 0
        %1035 = vmatpush.xpose.msra.mxu0 0.0
        %1036 = vmatpush.xpose.msra.mxu0 0.0
        %1037 = vmatpush.xpose.msra.mxu0 0.0
        %1038 = vmatpush.xpose.msra.mxu0 0.0
        %1039 = vmatpush.xpose.msra.mxu0 0.0
        %1040 = vmatpush.xpose.msra.mxu0 0.0
        %1041 = vmatpush.xpose.msra.mxu0 0.0
        %1042 = vmatpush.xpose.msra.mxu0 0.0
        %1043 = vmatpush.xpose.msra.mxu0 0.0
        %1044 = vmatpush.xpose.msra.mxu0 0.0
        %1045 = vmatpush.xpose.msra.mxu0 0.0
        %1046 = vmatpush.xpose.msra.mxu0 0.0
        %1047 = vmatpush.xpose.msra.mxu0 0.0
        %1048 = vmatpush.xpose.msra.mxu0 0.0
        %1049 = vmatpush.xpose.msra.mxu0 0.0
        %1050 = vmatpush.xpose.msra.mxu0 %v1033
        %1051 = vmatmul.f32.gmra.mxu0 %v1031
        %v1052 = vpop.f32.mrf.mxu0
        %v1053 = vadd.f32 0.0, %v1052
        %1054 = vdwg.mxu0
        %v1055 = vmul.f32 %v975, 0.35355338
        %v1056 = vmul.f32 %v1001, 0.35355338
        %v1057 = vmul.f32 %v1027, 0.35355338
        %v1058 = vmul.f32 %v1053, 0.35355338
        %v1059 = vadd.f32 %v1055, %v399
        %v1060 = vadd.f32 %v1056, %v399
        %v1061 = vadd.f32 %v1057, %v399
        %v1062 = vadd.f32 %v1058, %v399
        %v1063 = vsel %vm507, %v1059, -inf
        %1064 = vmax.xlane.f32.xlu0 %v1063
        %v1065 = vpop.xlane.xlu0 %1064
        %v1066 = vsel %vm507, %v1060, -inf
        %1067 = vmax.xlane.f32.xlu0 %v1066
        %v1068 = vpop.xlane.xlu0 %1067
        %v1069 = vsel %vm507, %v1061, -inf
        %1070 = vmax.xlane.f32.xlu0 %v1069
        %v1071 = vpop.xlane.xlu0 %1070
        %v1072 = vsel %vm507, %v1062, -inf
        %1073 = vmax.xlane.f32.xlu0 %v1072
        %v1074 = vpop.xlane.xlu0 %1073
        %v1075 = vsub.f32 %v1059, %v1065
        %v1076 = vsub.f32 %v1060, %v1068
        %v1077 = vsub.f32 %v1061, %v1071
        %v1078 = vsub.f32 %v1062, %v1074
        %v1079 = vmul.f32 %v1075, 1.442695
        %v1080 = vpow.pop %v1079
        %v1081 = vmul.f32 %v1076, 1.442695
        %v1082 = vpow.pop %v1081
        %v1083 = vmul.f32 %v1077, 1.442695
        %v1084 = vpow.pop %v1083
        %v1085 = vmul.f32 %v1078, 1.442695
        %v1086 = vpow.pop %v1085
        %v1087 = vsel %vm507, %v1080, 0.0
        %1088 = vadd.xlane.f32.xlu0 %v1087
        %v1089 = vpop.xlane.xlu0 %1088
        %v1090 = vsel %vm507, %v1082, 0.0
        %1091 = vadd.xlane.f32.xlu0 %v1090
        %v1092 = vpop.xlane.xlu0 %1091
        %v1093 = vsel %vm507, %v1084, 0.0
        %1094 = vadd.xlane.f32.xlu0 %v1093
        %v1095 = vpop.xlane.xlu0 %1094
        %v1096 = vsel %vm507, %v1086, 0.0
        %1097 = vadd.xlane.f32.xlu0 %v1096
        %v1098 = vpop.xlane.xlu0 %1097
        %v1099 = vrcp.pop %v1089
        %v1100 = vrcp.pop %v1092
        %v1101 = vrcp.pop %v1095
        %v1102 = vrcp.pop %v1098
        %v1103 = vmul.f32 %v1080, %v1099
        %v1104 = vmul.f32 %v1082, %v1100
        %v1105 = vmul.f32 %v1084, %v1101
        %v1106 = vmul.f32 %v1086, %v1102
        %v1108 = vsel %vm507, %v1103, 0
        %1110 = vmatpush.msra.mxu0 0.0
        %1111 = vmatpush.msra.mxu0 0.0
        %1112 = vmatpush.msra.mxu0 0.0
        %1113 = vmatpush.msra.mxu0 0.0
        %1114 = vmatpush.msra.mxu0 0.0
        %1115 = vmatpush.msra.mxu0 0.0
        %1116 = vmatpush.msra.mxu0 0.0
        %1117 = vmatpush.msra.mxu0 0.0
        %1118 = vmatpush.msra.mxu0 0.0
        %1119 = vmatpush.msra.mxu0 0.0
        %1120 = vmatpush.msra.mxu0 0.0
        %1121 = vmatpush.msra.mxu0 0.0
        %1122 = vmatpush.msra.mxu0 0.0
        %1123 = vmatpush.msra.mxu0 0.0
        %1124 = vmatpush.msra.mxu0 0.0
        %1125 = vmatpush.msra.mxu0 %v912
        %1126 = vmatmul.f32.gmra.mxu0 %v1108
        %v1127 = vpop.f32.mrf.mxu0
        %v1128 = vadd.f32 0.0, %v1127
        %1129 = vdwg.mxu0
        %v1131 = vsel %vm507, %v1104, 0
        %1133 = vmatpush.msra.mxu0 0.0
        %1134 = vmatpush.msra.mxu0 0.0
        %1135 = vmatpush.msra.mxu0 0.0
        %1136 = vmatpush.msra.mxu0 0.0
        %1137 = vmatpush.msra.mxu0 0.0
        %1138 = vmatpush.msra.mxu0 0.0
        %1139 = vmatpush.msra.mxu0 0.0
        %1140 = vmatpush.msra.mxu0 0.0
        %1141 = vmatpush.msra.mxu0 0.0
        %1142 = vmatpush.msra.mxu0 0.0
        %1143 = vmatpush.msra.mxu0 0.0
        %1144 = vmatpush.msra.mxu0 0.0
        %1145 = vmatpush.msra.mxu0 0.0
        %1146 = vmatpush.msra.mxu0 0.0
        %1147 = vmatpush.msra.mxu0 0.0
        %1148 = vmatpush.msra.mxu0 %v943
        %1149 = vmatmul.f32.gmra.mxu0 %v1131
        %v1150 = vpop.f32.mrf.mxu0
        %v1151 = vadd.f32 0.0, %v1150
        %1152 = vdwg.mxu0
        %v1154 = vsel %vm507, %v1105, 0
        %1156 = vmatpush.msra.mxu0 0.0
        %1157 = vmatpush.msra.mxu0 0.0
        %1158 = vmatpush.msra.mxu0 0.0
        %1159 = vmatpush.msra.mxu0 0.0
        %1160 = vmatpush.msra.mxu0 0.0
        %1161 = vmatpush.msra.mxu0 0.0
        %1162 = vmatpush.msra.mxu0 0.0
        %1163 = vmatpush.msra.mxu0 0.0
        %1164 = vmatpush.msra.mxu0 0.0
        %1165 = vmatpush.msra.mxu0 0.0
        %1166 = vmatpush.msra.mxu0 0.0
        %1167 = vmatpush.msra.mxu0 0.0
        %1168 = vmatpush.msra.mxu0 0.0
        %1169 = vmatpush.msra.mxu0 0.0
        %1170 = vmatpush.msra.mxu0 0.0
        %1171 = vmatpush.msra.mxu0 %v946
        %1172 = vmatmul.f32.gmra.mxu0 %v1154
        %v1173 = vpop.f32.mrf.mxu0
        %v1174 = vadd.f32 0.0, %v1173
        %1175 = vdwg.mxu0
        %v1177 = vsel %vm507, %v1106, 0
        %1179 = vmatpush.msra.mxu0 0.0
        %1180 = vmatpush.msra.mxu0 0.0
        %1181 = vmatpush.msra.mxu0 0.0
        %1182 = vmatpush.msra.mxu0 0.0
        %1183 = vmatpush.msra.mxu0 0.0
        %1184 = vmatpush.msra.mxu0 0.0
        %1185 = vmatpush.msra.mxu0 0.0
        %1186 = vmatpush.msra.mxu0 0.0
        %1187 = vmatpush.msra.mxu0 0.0
        %1188 = vmatpush.msra.mxu0 0.0
        %1189 = vmatpush.msra.mxu0 0.0
        %1190 = vmatpush.msra.mxu0 0.0
        %1191 = vmatpush.msra.mxu0 0.0
        %1192 = vmatpush.msra.mxu0 0.0
        %1193 = vmatpush.msra.mxu0 0.0
        %1194 = vmatpush.msra.mxu0 %v949
        %1195 = vmatmul.f32.gmra.mxu0 %v1177
        %v1196 = vpop.f32.mrf.mxu0
        %v1197 = vadd.f32 0.0, %v1196
        %1198 = vdwg.mxu0
        %v1199 = vadd.f32 %v1128, %v1151
        %v1200 = vadd.f32 %v1199, %v1174
        %v1201 = vadd.f32 %v1200, %v1197
        %s1202 = scalar_lea.vmem [#allocation5], 4
        %v1203 = vld [vmem:[%s1202] sm:$0x3]
        %v1204 = vadd.f32 %v881, %v1201
        %v1205 = vsel %vm401, %v1204, 0.0
        %1206 = vadd.xlane.f32.xlu0 %v1205
        %v1207 = vpop.xlane.xlu0 %1206
        %v1208 = vmul.f32 %v1207, %v411
        %v1209 = vmul.f32 %v1204, %v1204
        %v1210 = vsel %vm401, %v1209, 0.0
        %1211 = vadd.xlane.f32.xlu0 %v1210
        %v1212 = vpop.xlane.xlu0 %1211
        %v1213 = vmul.f32 %v1212, %v411
        %v1214 = vmul.f32 %v1208, %v1208
        %v1215 = vsub.f32 %v1213, %v1214
        %v1216 = vsub.f32 %v1204, %v1208
        %v1217 = vadd.f32 %v1215, 1e-06
        %v1218 = vrsqrt.pop %v1217
        %v1219 = vmul.f32 %v1218, %v1217
        %v1220 = vmul.f32 %v1219, %v1218
        %v1221 = vmul.f32 0.5, %v1220
        %v1222 = vsub.f32 1.5, %v1221
        %v1223 = vmul.f32 %v1218, %v1222
        %vm1224 = vweird.f32 %v1217
        %vm1225 = vweird.f32 %v1218
        %vm1226 = vmor %vm1224, %vm1225
        %v1227 = vsel %vm1226, %v1218, %v1223
        %v1228 = vmul.f32 %v1216, %v1227
        %v1229 = vperm.slane %v1203, 0
        %v1230 = vmul.f32 %v1228, %v1229
        %v1231 = vperm.slane %v1203, 1
        %v1232 = vadd.f32 %v1230, %v1231
        %s1233 = scalar_lea.vmem [#allocation7], 2
        %v1234 = vld [vmem:[%s1233] sm:$0x3]
        %s1235 = scalar_lea.vmem %s4, 32
        %v1236 = vld [vmem:[%s1235] sm:$0xff]
        %v1237 = vld [vmem:[%s1235 + $0x8] sm:$0xff]
        %v1238 = vld [vmem:[%s1235 + $0x10] sm:$0xff]
        %v1239 = vld [vmem:[%s1235 + $0x18] sm:$0xff]
        %v1240 = vperm.slane %v1234, 0
        %v1242 = vsel %vm401, %v1232, 0
        %1244 = vmatpush.msra.mxu0 0.0
        %1245 = vmatpush.msra.mxu0 0.0
        %1246 = vmatpush.msra.mxu0 0.0
        %1247 = vmatpush.msra.mxu0 0.0
        %1248 = vmatpush.msra.mxu0 0.0
        %1249 = vmatpush.msra.mxu0 0.0
        %1250 = vmatpush.msra.mxu0 0.0
        %1251 = vmatpush.msra.mxu0 0.0
        %1252 = vmatpush.msra.mxu0 0.0
        %1253 = vmatpush.msra.mxu0 0.0
        %1254 = vmatpush.msra.mxu0 0.0
        %1255 = vmatpush.msra.mxu0 0.0
        %1256 = vmatpush.msra.mxu0 %v1239
        %1257 = vmatpush.msra.mxu0 %v1238
        %1258 = vmatpush.msra.mxu0 %v1237
        %1259 = vmatpush.msra.mxu0 %v1236
        %1260 = vmatmul.f32.gmra.mxu0 %v1242
        %v1261 = vpop.f32.mrf.mxu0
        %v1262 = vadd.f32 %v1240, %v1261
        %1263 = vdwg.mxu0
        %v1264 = vmax.f32 %v1262, 0.0
        %s1265 = scalar_lea.vmem %s6, 64
        %v1266 = vld [vmem:[%s1265] sm:$0xff]
        %v1267 = vld [vmem:[%s1265 + $0x8] sm:$0xff]
        %v1268 = vld [vmem:[%s1265 + $0x10] sm:$0xff]
        %v1269 = vld [vmem:[%s1265 + $0x18] sm:$0xff]
        %v1270 = vld [vmem:[%s1265 + $0x20] sm:$0xff]
        %v1271 = vld [vmem:[%s1265 + $0x28] sm:$0xff]
        %v1272 = vld [vmem:[%s1265 + $0x30] sm:$0xff]
        %v1273 = vld [vmem:[%s1265 + $0x38] sm:$0xff]
        %v1274 = vperm.slane %v1234, 1
        %v1276 = vsel %vm827, %v1264, 0
        %1278 = vmatpush.msra.mxu0 0.0
        %1279 = vmatpush.msra.mxu0 0.0
        %1280 = vmatpush.msra.mxu0 0.0
        %1281 = vmatpush.msra.mxu0 0.0
        %1282 = vmatpush.msra.mxu0 0.0
        %1283 = vmatpush.msra.mxu0 0.0
        %1284 = vmatpush.msra.mxu0 0.0
        %1285 = vmatpush.msra.mxu0 0.0
        %1286 = vmatpush.msra.mxu0 %v1273
        %1287 = vmatpush.msra.mxu0 %v1272
        %1288 = vmatpush.msra.mxu0 %v1271
        %1289 = vmatpush.msra.mxu0 %v1270
        %1290 = vmatpush.msra.mxu0 %v1269
        %1291 = vmatpush.msra.mxu0 %v1268
        %1292 = vmatpush.msra.mxu0 %v1267
        %1293 = vmatpush.msra.mxu0 %v1266
        %1294 = vmatmul.f32.gmra.mxu0 %v1276
        %v1295 = vpop.f32.mrf.mxu0
        %v1296 = vadd.f32 %v1274, %v1295
        %1297 = vdwg.mxu0
        %s1298 = scalar_lea.vmem [#allocation5], 8
        %v1299 = vld [vmem:[%s1298] sm:$0x3]
        %v1300 = vadd.f32 %v1232, %v1296
        %v1301 = vsel %vm401, %v1300, 0.0
        %1302 = vadd.xlane.f32.xlu0 %v1301
        %v1303 = vpop.xlane.xlu0 %1302
        %v1304 = vmul.f32 %v1303, %v411
        %v1305 = vmul.f32 %v1300, %v1300
        %v1306 = vsel %vm401, %v1305, 0.0
        %1307 = vadd.xlane.f32.xlu0 %v1306
        %v1308 = vpop.xlane.xlu0 %1307
        %v1309 = vmul.f32 %v1308, %v411
        %v1310 = vmul.f32 %v1304, %v1304
        %v1311 = vsub.f32 %v1309, %v1310
        %v1312 = vsub.f32 %v1300, %v1304
        %v1313 = vadd.f32 %v1311, 1e-06
        %v1314 = vrsqrt.pop %v1313
        %v1315 = vmul.f32 %v1314, %v1313
        %v1316 = vmul.f32 %v1315, %v1314
        %v1317 = vmul.f32 0.5, %v1316
        %v1318 = vsub.f32 1.5, %v1317
        %v1319 = vmul.f32 %v1314, %v1318
        %vm1320 = vweird.f32 %v1313
        %vm1321 = vweird.f32 %v1314
        %vm1322 = vmor %vm1320, %vm1321
        %v1323 = vsel %vm1322, %v1314, %v1319
        %v1324 = vmul.f32 %v1312, %v1323
        %v1325 = vperm.slane %v1299, 0
        %v1326 = vmul.f32 %v1324, %v1325
        %v1327 = vperm.slane %v1299, 1
        %v1328 = vadd.f32 %v1326, %v1327
        %v1329 = vld [vmem:[#allocation8] sm:$0xff]
        %v1330 = vld [vmem:[#allocation8 + $0x8] sm:$0xff]
        %v1331 = vld [vmem:[#allocation8 + $0x10] sm:$0xff]
        %v1332 = vld [vmem:[#allocation8 + $0x18] sm:$0xff]
        %v1334 = vsel %vm401, %v1328, 0
        %1336 = vmatpush.msra.mxu0 0.0
        %1337 = vmatpush.msra.mxu0 0.0
        %1338 = vmatpush.msra.mxu0 0.0
        %1339 = vmatpush.msra.mxu0 0.0
        %1340 = vmatpush.msra.mxu0 0.0
        %1341 = vmatpush.msra.mxu0 0.0
        %1342 = vmatpush.msra.mxu0 0.0
        %1343 = vmatpush.msra.mxu0 0.0
        %1344 = vmatpush.msra.mxu0 0.0
        %1345 = vmatpush.msra.mxu0 0.0
        %1346 = vmatpush.msra.mxu0 0.0
        %1347 = vmatpush.msra.mxu0 0.0
        %1348 = vmatpush.msra.mxu0 %v1332
        %1349 = vmatpush.msra.mxu0 %v1331
        %1350 = vmatpush.msra.mxu0 %v1330
        %1351 = vmatpush.msra.mxu0 %v1329
        %1352 = vmatmul.f32.gmra.mxu0 %v1334
        %v1353 = vpop.f32.mrf.mxu0
        %v1354 = vadd.f32 0.0, %v1353
        %1355 = vdwg.mxu0
        %1356 = vst [vmem:[%s383] sm:$0xff] %v1354
        %s1357 = sand.u32 %s213, 1
        %s1358 = scalar_lea.sflag [#allocation4], %s1357
        %s1359 = sand.u32 %s213, 1
        %s1360 = smul.addr %s1359, 8
        %s1361 = scalar_lea.vmem [#allocation10], %s1360
        // Predicated region
        $region69: #{tpu_custom_call.1} parent=51 // pred_check
          %p1362 = pneg %p223
        $region70: #{tpu_custom_call.1} parent=51 // pred_check_branch
          %1364 = sbr.rel (%p1362) target = $region72
        $region71: #{tpu_custom_call.1} parent=51 // pred_region
          %1366 = vsyncadd %s1358, 0
          %s1367 = smul.addr %s27, 8
          %s1368 = scalar_lea.hbm %s8, %s1367
          %s1370 = sshll.u32 %s1361, 4
          %s1371 = int_to_ptr.vmem [resolvable:$true] %s1370
          %s1372 = sshll.u32 %s1368, 4
          %s1373 = int_to_ptr.hbm [resolvable:$true] %s1372
          %1375 = dma.vmem_to_hbm [thread:$0]  %s1371, 128, %s1373, %s1358
        $region72: #{tpu_custom_call.1} parent=51 // pred_fallthru
          _
      $region52: #{tpu_custom_call.1} parent=5 // pred_fallthru
        _
      %p1376 = scmp.le.s32.totalorder 2, %s22
      // Predicated region
      $region73: #{tpu_custom_call.1} parent=5 // pred_check
        %p1377 = pneg %p1376
      $region74: #{tpu_custom_call.1} parent=5 // pred_check_branch
        %1379 = sbr.rel (%p1377) target = $region76
      $region75: #{tpu_custom_call.1} parent=5 // pred_region
        %s1380 = ssub.s32 %s22, 2
        // Predicated region
        $region77: #{tpu_custom_call.1} parent=75 // pred_check
          %p1381 = pneg %p229
        $region78: #{tpu_custom_call.1} parent=75 // pred_check_branch
          %1383 = sbr.rel (%p1381) target = $region80
        $region79: #{tpu_custom_call.1} parent=75 // pred_region
          %s1384 = sand.u32 %s214, 1
          %s1385 = scalar_lea.sflag [#allocation4], %s1384
          %s1386 = sand.u32 %s214, 1
          %s1387 = smul.addr %s1386, 8
          %s1388 = scalar_lea.vmem [#allocation10], %s1387
          %1390 = dma.done %s1385, 128
        $region80: #{tpu_custom_call.1} parent=75 // pred_fallthru
          _
      $region76: #{tpu_custom_call.1} parent=5 // pred_fallthru
        _
    $region6: #{tpu_custom_call.1} parent=1 // loop_footer
      %s26 = sadd.s32 1, %s22
    $region7: #{tpu_custom_call.1} parent=1 // loop_footer_branch
      %21 = sbr.rel target = $region3
    $region8: #{tpu_custom_call.1} parent=1 // loop_exit
      _
    %1391 = vsyncpa [#allocation3], 1
    %s1392 = scalar_lea.sflag [#allocation3], 1
    %1393 = vsyncpa %s1392, 1
    %1394 = vsyncpa [#allocation6], 1
    %1395 = vsyncpa [#allocation9], 1
    %1396 = vsyncpa [#allocation4], 1
    %s1397 = scalar_lea.sflag [#allocation4], 1
    %1398 = vsyncpa %s1397, 1

</llo_original>
